<compile_context>
chip_gen: v5e
topology: v5e:2x2
jax: 0.10.0
libtpu: 0.0.40
codegen_flags: <defaults>
</compile_context>

<pallas_src>
import functools
import math

import jax
import jax.numpy as jnp
from jax.experimental import pallas as pl
from jax.experimental.pallas import tpu as pltpu


# ----------------------------------------------------------------------------
# Fused Pallas kernel
# ----------------------------------------------------------------------------
def _norm(x, eps=1e-5):
    # LayerNorm with gamma/beta already folded into the following matmul.
    mu = jnp.mean(x, axis=-1, keepdims=True)
    var = jnp.mean((x - mu) ** 2, axis=-1, keepdims=True)
    return (x - mu) * jax.lax.rsqrt(var + eps)


def _fused_str_kernel(tok_ref,
                      embed_w_ref, qkv_w_ref, proj_w_ref,
                      ffn1_w_ref, ffn2_w_ref, head_w_ref,
                      bias_ref, out_ref,
                      *, batch, seq, n_heads, d_model, d_inner):
    bf16 = jnp.bfloat16
    bias = bias_ref[...]                                   # (8, 256) f32 slab

    x = tok_ref[...]                                       # (B*S, 128) bf16
    # patch embedding (token-wise; batch folded into rows)
    h = jnp.dot(x, embed_w_ref[...], preferred_element_type=jnp.float32)
    h = h + bias[0:1, :d_model]                            # (B*S, d) f32

    # --- attention sub-block (pre-LN; LN1 gamma/beta folded into qkv_w/b) ---
    hn = _norm(h).astype(bf16)
    qkv = jnp.dot(hn, qkv_w_ref[...], preferred_element_type=jnp.float32)
    qkv = qkv + bias[1:2, :3 * d_model]                    # (B*S, 3d) f32

    hd = d_model // n_heads
    scale = 1.0 / math.sqrt(hd)
    pw = proj_w_ref[...]                                   # (d, d) bf16
    img_blocks = []
    for b in range(batch):                                 # static per-image loop
        r0 = b * seq
        acc = jnp.zeros((seq, d_model), jnp.float32)
        for hx in range(n_heads):                          # static head loop
            q = qkv[r0:r0 + seq, hx * hd:(hx + 1) * hd].astype(bf16)
            k = qkv[r0:r0 + seq,
                    d_model + hx * hd:d_model + (hx + 1) * hd].astype(bf16)
            v = qkv[r0:r0 + seq,
                    2 * d_model + hx * hd:2 * d_model + (hx + 1) * hd].astype(bf16)
            # K transpose folded into MXU operand feed (no materialized k.T)
            s = jax.lax.dot_general(q, k, (((1,), (1,)), ((), ())),
                                    preferred_element_type=jnp.float32) * scale
            m = jnp.max(s, axis=-1, keepdims=True)
            p = jnp.exp(s - m)
            p = p / jnp.sum(p, axis=-1, keepdims=True)     # exact softmax, f32
            ctx = jnp.dot(p.astype(bf16), v,
                          preferred_element_type=jnp.float32)
            # per-head accumulation straight into the projection
            # (row slice of proj_w is sublane aligned; no lane concat of heads)
            acc = acc + jnp.dot(ctx.astype(bf16),
                                pw[hx * hd:(hx + 1) * hd, :],
                                preferred_element_type=jnp.float32)
        img_blocks.append(acc)
    proj = jnp.concatenate(img_blocks, axis=0)             # sublane concat (cheap)
    h = h + proj + bias[2:3, :d_model]                     # fused residual + bias

    # --- FFN sub-block (pre-LN; LN2 gamma/beta folded into ffn1_w/b) ---
    hn = _norm(h).astype(bf16)
    ff = jnp.dot(hn, ffn1_w_ref[...], preferred_element_type=jnp.float32)
    # TODO(synk): PyTorch nn.GELU defaults to exact erf; tanh approximation
    # used here for guaranteed Mosaic lowering (small numeric divergence).
    ff = jax.nn.gelu(ff + bias[3:4, :d_inner])             # f32 VPU/EUP math
    ff2 = jnp.dot(ff.astype(bf16), ffn2_w_ref[...],
                  preferred_element_type=jnp.float32)
    h = h + ff2 + bias[4:5, :d_model]                      # fused residual + bias

    # classification head (lane-padded to 128 output classes)
    logits = jnp.dot(h.astype(bf16), head_w_ref[...],
                     preferred_element_type=jnp.float32)
    out_ref[...] = (logits + bias[5:6, :out_ref.shape[1]]).astype(out_ref.dtype)


_WEIGHT_NAMES = ("embed_w", "qkv_w", "proj_w", "ffn1_w", "ffn2_w", "head_w",
                 "bias_slab")


def fused_forward(tokens, params, *, batch, seq, n_heads, d_model, d_inner,
                  num_class_padded):
    """tokens: (B*S, Dp_pad) bf16 -> padded logits (B*S, num_class_padded) f32."""
    BS, _ = tokens.shape
    assert BS == batch * seq
    weights = [params[n] for n in _WEIGHT_NAMES]

    kernel = functools.partial(_fused_str_kernel, batch=batch, seq=seq,
                               n_heads=n_heads, d_model=d_model,
                               d_inner=d_inner)
    vmem = pl.BlockSpec(memory_space=pltpu.MemorySpace.VMEM)
    # single grid step (B folded into rows): no grid, whole arrays in VMEM
    return pl.pallas_call(
        kernel,
        out_shape=jax.ShapeDtypeStruct((BS, num_class_padded), jnp.float32),
        in_specs=[vmem] * (1 + len(weights)),
        out_specs=vmem,
    )(tokens, *weights)


# ----------------------------------------------------------------------------
# Model config / params (SVTR-style stand-in for BaseModel)
# ----------------------------------------------------------------------------
class Opt:
    backbone = "tiny"          # not 'svtr_base' -> keep small shapes
    imgH, imgW = 16, 32
    in_ch = 3
    patch = 4
    d_model, d_inner = 64, 256
    n_heads = 2
    num_class = 37


def _pad_to(n, mult):
    return max(mult, ((n + mult - 1) // mult) * mult)


def init_params(key, opt):
    patch_dim = opt.in_ch * opt.patch * opt.patch           # 48
    pd_p = _pad_to(patch_dim, 128)                           # 128 (lane-dense)
    nc_p = _pad_to(opt.num_class, 128)                       # 128 (lane-dense)
    d, di = opt.d_model, opt.d_inner
    ks = jax.random.split(key, 6)

    def dense(k, fan_in, fan_out):
        w = jax.random.normal(k, (fan_in, fan_out), jnp.float32) / math.sqrt(fan_in)
        b = jnp.zeros((fan_out,), jnp.float32)
        return w, b

    ew, eb = dense(ks[0], patch_dim, d)
    qw, qb = dense(ks[1], d, 3 * d)
    pw, pb = dense(ks[2], d, d)
    f1w, f1b = dense(ks[3], d, di)
    f2w, f2b = dense(ks[4], di, d)
    hw, hb = dense(ks[5], d, opt.num_class)

    ln1_g, ln1_b = jnp.ones((d,), jnp.float32), jnp.zeros((d,), jnp.float32)
    ln2_g, ln2_b = jnp.ones((d,), jnp.float32), jnp.zeros((d,), jnp.float32)

    # Fold LN gamma/beta into the following matmul (exact):
    #   LN(h) @ W + b = ((h-mu)*rsqrt) @ (gamma[:,None]*W) + (beta @ W + b)
    qkv_w_f = ln1_g[:, None] * qw
    qkv_b_f = ln1_b @ qw + qb
    ffn1_w_f = ln2_g[:, None] * f1w
    ffn1_b_f = ln2_b @ f1w + f1b

    p = {}
    # bf16 weights for the MXU (inputs zero-padded 48 -> 128, exact)
    p["embed_w"] = (jnp.zeros((pd_p, d), jnp.float32)
                    .at[:patch_dim].set(ew).astype(jnp.bfloat16))
    p["qkv_w"] = qkv_w_f.astype(jnp.bfloat16)
    p["proj_w"] = pw.astype(jnp.bfloat16)
    p["ffn1_w"] = ffn1_w_f.astype(jnp.bfloat16)
    p["ffn2_w"] = f2w.astype(jnp.bfloat16)
    # head classes zero-padded 37 -> 128 for lane-dense stores (exact zeros)
    p["head_w"] = (jnp.zeros((d, nc_p), jnp.float32)
                   .at[:, :opt.num_class].set(hw).astype(jnp.bfloat16))

    # all biases packed into one (8, 256) f32 slab (one DMA instead of many)
    slab_w = max(3 * d, di, nc_p)                            # 256
    slab = jnp.zeros((8, slab_w), jnp.float32)
    slab = slab.at[0, :d].set(eb)
    slab = slab.at[1, :3 * d].set(qkv_b_f)
    slab = slab.at[2, :d].set(pb)
    slab = slab.at[3, :di].set(ffn1_b_f)
    slab = slab.at[4, :d].set(f2b)
    slab = slab.at[5, :opt.num_class].set(hb)
    p["bias_slab"] = slab
    return p


def model_forward(params, x, opt):
    """x: (B, C, H, W) float32 (PyTorch NCHW) -> logits (B, S, num_class)."""
    B, C, H, W = x.shape
    P = opt.patch
    patch_dim = C * P * P
    pd_p = params["embed_w"].shape[0]
    nc_p = params["head_w"].shape[1]
    S = (H // P) * (W // P)

    # glue: NCHW -> non-overlapping PxP patch tokens, batch folded into rows
    x = x.reshape(B, C, H // P, P, W // P, P)
    x = x.transpose(0, 2, 4, 1, 3, 5)                        # (B, H/P, W/P, C, P, P)
    tokens = x.reshape(B * S, patch_dim)
    tokens = jnp.pad(tokens, ((0, 0), (0, pd_p - patch_dim))).astype(jnp.bfloat16)

    logits_padded = fused_forward(tokens, params,
                                  batch=B, seq=S,
                                  n_heads=opt.n_heads,
                                  d_model=opt.d_model,
                                  d_inner=opt.d_inner,
                                  num_class_padded=nc_p)     # (B*S, nc_p)
    return logits_padded.reshape(B, S, nc_p)[:, :, :opt.num_class]


if __name__ == "__main__":
    opt = Opt()
    key = jax.random.PRNGKey(0)
    k_param, k_input = jax.random.split(key)
    params = init_params(k_param, opt)
    x = jax.random.normal(k_input, (2, opt.in_ch, opt.imgH, opt.imgW), jnp.float32)

    fwd = jax.jit(functools.partial(model_forward, opt=opt))
    out = fwd(params, x)
    out = jax.block_until_ready(out)
    assert out.shape == (2, (opt.imgH // opt.patch) * (opt.imgW // opt.patch),
                         opt.num_class)
    assert jnp.all(jnp.isfinite(out))
    print("KERNEL_OK")
</pallas_src>

<mosaic_0001>
module attributes {stable_mosaic.version = 11 : i64} {
  func.func @_fused_str_kernel(%arg0: memref<64x128xbf16, #tpu.memory_space<vmem>>, %arg1: memref<128x64xbf16, #tpu.memory_space<vmem>>, %arg2: memref<64x192xbf16, #tpu.memory_space<vmem>>, %arg3: memref<64x64xbf16, #tpu.memory_space<vmem>>, %arg4: memref<64x256xbf16, #tpu.memory_space<vmem>>, %arg5: memref<256x64xbf16, #tpu.memory_space<vmem>>, %arg6: memref<64x128xbf16, #tpu.memory_space<vmem>>, %arg7: memref<8x256xf32, #tpu.memory_space<vmem>>, %arg8: memref<64x128xf32, #tpu.memory_space<vmem>>) attributes {dimension_semantics = [], scalar_prefetch = 0 : i64, scratch_operands = 0 : i64, tpu.core_type = #tpu.core_type<tc>} {
    %c0 = arith.constant 0 : index
    %c0_0 = arith.constant 0 : index
    %0 = vector.load %arg7[%c0, %c0_0] : memref<8x256xf32, #tpu.memory_space<vmem>>, vector<8x256xf32>
    %c0_1 = arith.constant 0 : index
    %c0_2 = arith.constant 0 : index
    %1 = vector.load %arg0[%c0_1, %c0_2] : memref<64x128xbf16, #tpu.memory_space<vmem>>, vector<64x128xbf16>
    %c0_3 = arith.constant 0 : index
    %c0_4 = arith.constant 0 : index
    %2 = vector.load %arg1[%c0_3, %c0_4] : memref<128x64xbf16, #tpu.memory_space<vmem>>, vector<128x64xbf16>
    %cst = arith.constant dense<0.000000e+00> : vector<64x64xf32>
    %3 = tpu.matmul %1, %2, %cst {dimension_numbers = #tpu.dot_dimension_numbers<[1], [0], [0], [1], [0, 0, 1, 1], [], []>} : vector<64x128xbf16>, vector<128x64xbf16>, vector<64x64xf32> -> vector<64x64xf32>
    %4 = vector.extract_strided_slice %0 {offsets = [0, 0], sizes = [1, 64], strides = [1, 1]} : vector<8x256xf32> to vector<1x64xf32>
    %5 = vector.broadcast %4 : vector<1x64xf32> to vector<64x64xf32>
    %6 = arith.addf %3, %5 : vector<64x64xf32>
    %cst_5 = arith.constant dense<0.000000e+00> : vector<64xf32>
    %7 = vector.multi_reduction <add>, %6, %cst_5 [1] : vector<64x64xf32> to vector<64xf32>
    %8 = vector.shape_cast %7 : vector<64xf32> to vector<64x1xf32>
    %cst_6 = arith.constant 6.400000e+01 : f32
    %9 = vector.broadcast %cst_6 : f32 to vector<64x1xf32>
    %10 = arith.divf %8, %9 : vector<64x1xf32>
    %11 = vector.broadcast %10 : vector<64x1xf32> to vector<64x64xf32>
    %12 = arith.subf %6, %11 : vector<64x64xf32>
    %13 = arith.mulf %12, %12 : vector<64x64xf32>
    %cst_7 = arith.constant dense<0.000000e+00> : vector<64xf32>
    %14 = vector.multi_reduction <add>, %13, %cst_7 [1] : vector<64x64xf32> to vector<64xf32>
    %15 = vector.shape_cast %14 : vector<64xf32> to vector<64x1xf32>
    %cst_8 = arith.constant 6.400000e+01 : f32
    %16 = vector.broadcast %cst_8 : f32 to vector<64x1xf32>
    %17 = arith.divf %15, %16 : vector<64x1xf32>
    %18 = vector.broadcast %10 : vector<64x1xf32> to vector<64x64xf32>
    %19 = arith.subf %6, %18 : vector<64x64xf32>
    %cst_9 = arith.constant 9.99999974E-6 : f32
    %20 = vector.broadcast %cst_9 : f32 to vector<64x1xf32>
    %21 = arith.addf %17, %20 : vector<64x1xf32>
    %22 = math.rsqrt %21 : vector<64x1xf32>
    %23 = vector.broadcast %22 : vector<64x1xf32> to vector<64x64xf32>
    %24 = arith.mulf %19, %23 : vector<64x64xf32>
    %25 = arith.truncf %24 : vector<64x64xf32> to vector<64x64xbf16>
    %c0_10 = arith.constant 0 : index
    %c0_11 = arith.constant 0 : index
    %26 = vector.load %arg2[%c0_10, %c0_11] : memref<64x192xbf16, #tpu.memory_space<vmem>>, vector<64x192xbf16>
    %cst_12 = arith.constant dense<0.000000e+00> : vector<64x192xf32>
    %27 = tpu.matmul %25, %26, %cst_12 {dimension_numbers = #tpu.dot_dimension_numbers<[1], [0], [0], [1], [0, 0, 1, 1], [], []>} : vector<64x64xbf16>, vector<64x192xbf16>, vector<64x192xf32> -> vector<64x192xf32>
    %28 = vector.extract_strided_slice %0 {offsets = [1, 0], sizes = [1, 192], strides = [1, 1]} : vector<8x256xf32> to vector<1x192xf32>
    %29 = vector.broadcast %28 : vector<1x192xf32> to vector<64x192xf32>
    %30 = arith.addf %27, %29 : vector<64x192xf32>
    %c0_13 = arith.constant 0 : index
    %c0_14 = arith.constant 0 : index
    %31 = vector.load %arg3[%c0_13, %c0_14] : memref<64x64xbf16, #tpu.memory_space<vmem>>, vector<64x64xbf16>
    %cst_15 = arith.constant 0.000000e+00 : f32
    %32 = vector.broadcast %cst_15 : f32 to vector<32x64xf32>
    %33 = vector.extract_strided_slice %30 {offsets = [0, 0], sizes = [32, 32], strides = [1, 1]} : vector<64x192xf32> to vector<32x32xf32>
    %34 = arith.truncf %33 : vector<32x32xf32> to vector<32x32xbf16>
    %35 = vector.extract_strided_slice %30 {offsets = [0, 64], sizes = [32, 32], strides = [1, 1]} : vector<64x192xf32> to vector<32x32xf32>
    %36 = arith.truncf %35 : vector<32x32xf32> to vector<32x32xbf16>
    %37 = vector.extract_strided_slice %30 {offsets = [0, 128], sizes = [32, 32], strides = [1, 1]} : vector<64x192xf32> to vector<32x32xf32>
    %38 = arith.truncf %37 : vector<32x32xf32> to vector<32x32xbf16>
    %cst_16 = arith.constant dense<0.000000e+00> : vector<32x32xf32>
    %39 = tpu.matmul %34, %36, %cst_16 {dimension_numbers = #tpu.dot_dimension_numbers<[1], [1], [0], [0], [0, 0, 1, 0], [], []>} : vector<32x32xbf16>, vector<32x32xbf16>, vector<32x32xf32> -> vector<32x32xf32>
    %cst_17 = arith.constant 0.176776692 : f32
    %40 = vector.broadcast %cst_17 : f32 to vector<32x32xf32>
    %41 = arith.mulf %39, %40 : vector<32x32xf32>
    %cst_18 = arith.constant dense<0xFF800000> : vector<32xf32>
    %42 = vector.multi_reduction <maximumf>, %41, %cst_18 [1] : vector<32x32xf32> to vector<32xf32>
    %43 = vector.shape_cast %42 : vector<32xf32> to vector<32x1xf32>
    %44 = vector.broadcast %43 : vector<32x1xf32> to vector<32x32xf32>
    %45 = arith.subf %41, %44 : vector<32x32xf32>
    %46 = math.exp %45 : vector<32x32xf32>
    %cst_19 = arith.constant dense<0.000000e+00> : vector<32xf32>
    %47 = vector.multi_reduction <add>, %46, %cst_19 [1] : vector<32x32xf32> to vector<32xf32>
    %48 = vector.shape_cast %47 : vector<32xf32> to vector<32x1xf32>
    %49 = vector.broadcast %48 : vector<32x1xf32> to vector<32x32xf32>
    %50 = arith.divf %46, %49 : vector<32x32xf32>
    %51 = arith.truncf %50 : vector<32x32xf32> to vector<32x32xbf16>
    %cst_20 = arith.constant dense<0.000000e+00> : vector<32x32xf32>
    %52 = tpu.matmul %51, %38, %cst_20 {dimension_numbers = #tpu.dot_dimension_numbers<[1], [0], [0], [1], [0, 0, 1, 1], [], []>} : vector<32x32xbf16>, vector<32x32xbf16>, vector<32x32xf32> -> vector<32x32xf32>
    %53 = arith.truncf %52 : vector<32x32xf32> to vector<32x32xbf16>
    %54 = vector.extract_strided_slice %31 {offsets = [0, 0], sizes = [32, 64], strides = [1, 1]} : vector<64x64xbf16> to vector<32x64xbf16>
    %cst_21 = arith.constant dense<0.000000e+00> : vector<32x64xf32>
    %55 = tpu.matmul %53, %54, %cst_21 {dimension_numbers = #tpu.dot_dimension_numbers<[1], [0], [0], [1], [0, 0, 1, 1], [], []>} : vector<32x32xbf16>, vector<32x64xbf16>, vector<32x64xf32> -> vector<32x64xf32>
    %56 = arith.addf %32, %55 : vector<32x64xf32>
    %57 = vector.extract_strided_slice %30 {offsets = [0, 32], sizes = [32, 32], strides = [1, 1]} : vector<64x192xf32> to vector<32x32xf32>
    %58 = arith.truncf %57 : vector<32x32xf32> to vector<32x32xbf16>
    %59 = vector.extract_strided_slice %30 {offsets = [0, 96], sizes = [32, 32], strides = [1, 1]} : vector<64x192xf32> to vector<32x32xf32>
    %60 = arith.truncf %59 : vector<32x32xf32> to vector<32x32xbf16>
    %61 = vector.extract_strided_slice %30 {offsets = [0, 160], sizes = [32, 32], strides = [1, 1]} : vector<64x192xf32> to vector<32x32xf32>
    %62 = arith.truncf %61 : vector<32x32xf32> to vector<32x32xbf16>
    %cst_22 = arith.constant dense<0.000000e+00> : vector<32x32xf32>
    %63 = tpu.matmul %58, %60, %cst_22 {dimension_numbers = #tpu.dot_dimension_numbers<[1], [1], [0], [0], [0, 0, 1, 0], [], []>} : vector<32x32xbf16>, vector<32x32xbf16>, vector<32x32xf32> -> vector<32x32xf32>
    %cst_23 = arith.constant 0.176776692 : f32
    %64 = vector.broadcast %cst_23 : f32 to vector<32x32xf32>
    %65 = arith.mulf %63, %64 : vector<32x32xf32>
    %cst_24 = arith.constant dense<0xFF800000> : vector<32xf32>
    %66 = vector.multi_reduction <maximumf>, %65, %cst_24 [1] : vector<32x32xf32> to vector<32xf32>
    %67 = vector.shape_cast %66 : vector<32xf32> to vector<32x1xf32>
    %68 = vector.broadcast %67 : vector<32x1xf32> to vector<32x32xf32>
    %69 = arith.subf %65, %68 : vector<32x32xf32>
    %70 = math.exp %69 : vector<32x32xf32>
    %cst_25 = arith.constant dense<0.000000e+00> : vector<32xf32>
    %71 = vector.multi_reduction <add>, %70, %cst_25 [1] : vector<32x32xf32> to vector<32xf32>
    %72 = vector.shape_cast %71 : vector<32xf32> to vector<32x1xf32>
    %73 = vector.broadcast %72 : vector<32x1xf32> to vector<32x32xf32>
    %74 = arith.divf %70, %73 : vector<32x32xf32>
    %75 = arith.truncf %74 : vector<32x32xf32> to vector<32x32xbf16>
    %cst_26 = arith.constant dense<0.000000e+00> : vector<32x32xf32>
    %76 = tpu.matmul %75, %62, %cst_26 {dimension_numbers = #tpu.dot_dimension_numbers<[1], [0], [0], [1], [0, 0, 1, 1], [], []>} : vector<32x32xbf16>, vector<32x32xbf16>, vector<32x32xf32> -> vector<32x32xf32>
    %77 = arith.truncf %76 : vector<32x32xf32> to vector<32x32xbf16>
    %78 = vector.extract_strided_slice %31 {offsets = [32, 0], sizes = [32, 64], strides = [1, 1]} : vector<64x64xbf16> to vector<32x64xbf16>
    %cst_27 = arith.constant dense<0.000000e+00> : vector<32x64xf32>
    %79 = tpu.matmul %77, %78, %cst_27 {dimension_numbers = #tpu.dot_dimension_numbers<[1], [0], [0], [1], [0, 0, 1, 1], [], []>} : vector<32x32xbf16>, vector<32x64xbf16>, vector<32x64xf32> -> vector<32x64xf32>
    %80 = arith.addf %56, %79 : vector<32x64xf32>
    %cst_28 = arith.constant 0.000000e+00 : f32
    %81 = vector.broadcast %cst_28 : f32 to vector<32x64xf32>
    %82 = vector.extract_strided_slice %30 {offsets = [32, 0], sizes = [32, 32], strides = [1, 1]} : vector<64x192xf32> to vector<32x32xf32>
    %83 = arith.truncf %82 : vector<32x32xf32> to vector<32x32xbf16>
    %84 = vector.extract_strided_slice %30 {offsets = [32, 64], sizes = [32, 32], strides = [1, 1]} : vector<64x192xf32> to vector<32x32xf32>
    %85 = arith.truncf %84 : vector<32x32xf32> to vector<32x32xbf16>
    %86 = vector.extract_strided_slice %30 {offsets = [32, 128], sizes = [32, 32], strides = [1, 1]} : vector<64x192xf32> to vector<32x32xf32>
    %87 = arith.truncf %86 : vector<32x32xf32> to vector<32x32xbf16>
    %cst_29 = arith.constant dense<0.000000e+00> : vector<32x32xf32>
    %88 = tpu.matmul %83, %85, %cst_29 {dimension_numbers = #tpu.dot_dimension_numbers<[1], [1], [0], [0], [0, 0, 1, 0], [], []>} : vector<32x32xbf16>, vector<32x32xbf16>, vector<32x32xf32> -> vector<32x32xf32>
    %cst_30 = arith.constant 0.176776692 : f32
    %89 = vector.broadcast %cst_30 : f32 to vector<32x32xf32>
    %90 = arith.mulf %88, %89 : vector<32x32xf32>
    %cst_31 = arith.constant dense<0xFF800000> : vector<32xf32>
    %91 = vector.multi_reduction <maximumf>, %90, %cst_31 [1] : vector<32x32xf32> to vector<32xf32>
    %92 = vector.shape_cast %91 : vector<32xf32> to vector<32x1xf32>
    %93 = vector.broadcast %92 : vector<32x1xf32> to vector<32x32xf32>
    %94 = arith.subf %90, %93 : vector<32x32xf32>
    %95 = math.exp %94 : vector<32x32xf32>
    %cst_32 = arith.constant dense<0.000000e+00> : vector<32xf32>
    %96 = vector.multi_reduction <add>, %95, %cst_32 [1] : vector<32x32xf32> to vector<32xf32>
    %97 = vector.shape_cast %96 : vector<32xf32> to vector<32x1xf32>
    %98 = vector.broadcast %97 : vector<32x1xf32> to vector<32x32xf32>
    %99 = arith.divf %95, %98 : vector<32x32xf32>
    %100 = arith.truncf %99 : vector<32x32xf32> to vector<32x32xbf16>
    %cst_33 = arith.constant dense<0.000000e+00> : vector<32x32xf32>
    %101 = tpu.matmul %100, %87, %cst_33 {dimension_numbers = #tpu.dot_dimension_numbers<[1], [0], [0], [1], [0, 0, 1, 1], [], []>} : vector<32x32xbf16>, vector<32x32xbf16>, vector<32x32xf32> -> vector<32x32xf32>
    %102 = arith.truncf %101 : vector<32x32xf32> to vector<32x32xbf16>
    %103 = vector.extract_strided_slice %31 {offsets = [0, 0], sizes = [32, 64], strides = [1, 1]} : vector<64x64xbf16> to vector<32x64xbf16>
    %cst_34 = arith.constant dense<0.000000e+00> : vector<32x64xf32>
    %104 = tpu.matmul %102, %103, %cst_34 {dimension_numbers = #tpu.dot_dimension_numbers<[1], [0], [0], [1], [0, 0, 1, 1], [], []>} : vector<32x32xbf16>, vector<32x64xbf16>, vector<32x64xf32> -> vector<32x64xf32>
    %105 = arith.addf %81, %104 : vector<32x64xf32>
    %106 = vector.extract_strided_slice %30 {offsets = [32, 32], sizes = [32, 32], strides = [1, 1]} : vector<64x192xf32> to vector<32x32xf32>
    %107 = arith.truncf %106 : vector<32x32xf32> to vector<32x32xbf16>
    %108 = vector.extract_strided_slice %30 {offsets = [32, 96], sizes = [32, 32], strides = [1, 1]} : vector<64x192xf32> to vector<32x32xf32>
    %109 = arith.truncf %108 : vector<32x32xf32> to vector<32x32xbf16>
    %110 = vector.extract_strided_slice %30 {offsets = [32, 160], sizes = [32, 32], strides = [1, 1]} : vector<64x192xf32> to vector<32x32xf32>
    %111 = arith.truncf %110 : vector<32x32xf32> to vector<32x32xbf16>
    %cst_35 = arith.constant dense<0.000000e+00> : vector<32x32xf32>
    %112 = tpu.matmul %107, %109, %cst_35 {dimension_numbers = #tpu.dot_dimension_numbers<[1], [1], [0], [0], [0, 0, 1, 0], [], []>} : vector<32x32xbf16>, vector<32x32xbf16>, vector<32x32xf32> -> vector<32x32xf32>
    %cst_36 = arith.constant 0.176776692 : f32
    %113 = vector.broadcast %cst_36 : f32 to vector<32x32xf32>
    %114 = arith.mulf %112, %113 : vector<32x32xf32>
    %cst_37 = arith.constant dense<0xFF800000> : vector<32xf32>
    %115 = vector.multi_reduction <maximumf>, %114, %cst_37 [1] : vector<32x32xf32> to vector<32xf32>
    %116 = vector.shape_cast %115 : vector<32xf32> to vector<32x1xf32>
    %117 = vector.broadcast %116 : vector<32x1xf32> to vector<32x32xf32>
    %118 = arith.subf %114, %117 : vector<32x32xf32>
    %119 = math.exp %118 : vector<32x32xf32>
    %cst_38 = arith.constant dense<0.000000e+00> : vector<32xf32>
    %120 = vector.multi_reduction <add>, %119, %cst_38 [1] : vector<32x32xf32> to vector<32xf32>
    %121 = vector.shape_cast %120 : vector<32xf32> to vector<32x1xf32>
    %122 = vector.broadcast %121 : vector<32x1xf32> to vector<32x32xf32>
    %123 = arith.divf %119, %122 : vector<32x32xf32>
    %124 = arith.truncf %123 : vector<32x32xf32> to vector<32x32xbf16>
    %cst_39 = arith.constant dense<0.000000e+00> : vector<32x32xf32>
    %125 = tpu.matmul %124, %111, %cst_39 {dimension_numbers = #tpu.dot_dimension_numbers<[1], [0], [0], [1], [0, 0, 1, 1], [], []>} : vector<32x32xbf16>, vector<32x32xbf16>, vector<32x32xf32> -> vector<32x32xf32>
    %126 = arith.truncf %125 : vector<32x32xf32> to vector<32x32xbf16>
    %127 = vector.extract_strided_slice %31 {offsets = [32, 0], sizes = [32, 64], strides = [1, 1]} : vector<64x64xbf16> to vector<32x64xbf16>
    %cst_40 = arith.constant dense<0.000000e+00> : vector<32x64xf32>
    %128 = tpu.matmul %126, %127, %cst_40 {dimension_numbers = #tpu.dot_dimension_numbers<[1], [0], [0], [1], [0, 0, 1, 1], [], []>} : vector<32x32xbf16>, vector<32x64xbf16>, vector<32x64xf32> -> vector<32x64xf32>
    %129 = arith.addf %105, %128 : vector<32x64xf32>
    %130 = tpu.concatenate %80, %129 in 0 : vector<32x64xf32>, vector<32x64xf32> -> vector<64x64xf32>
    %131 = arith.addf %6, %130 : vector<64x64xf32>
    %132 = vector.extract_strided_slice %0 {offsets = [2, 0], sizes = [1, 64], strides = [1, 1]} : vector<8x256xf32> to vector<1x64xf32>
    %133 = vector.broadcast %132 : vector<1x64xf32> to vector<64x64xf32>
    %134 = arith.addf %131, %133 : vector<64x64xf32>
    %cst_41 = arith.constant dense<0.000000e+00> : vector<64xf32>
    %135 = vector.multi_reduction <add>, %134, %cst_41 [1] : vector<64x64xf32> to vector<64xf32>
    %136 = vector.shape_cast %135 : vector<64xf32> to vector<64x1xf32>
    %cst_42 = arith.constant 6.400000e+01 : f32
    %137 = vector.broadcast %cst_42 : f32 to vector<64x1xf32>
    %138 = arith.divf %136, %137 : vector<64x1xf32>
    %139 = vector.broadcast %138 : vector<64x1xf32> to vector<64x64xf32>
    %140 = arith.subf %134, %139 : vector<64x64xf32>
    %141 = arith.mulf %140, %140 : vector<64x64xf32>
    %cst_43 = arith.constant dense<0.000000e+00> : vector<64xf32>
    %142 = vector.multi_reduction <add>, %141, %cst_43 [1] : vector<64x64xf32> to vector<64xf32>
    %143 = vector.shape_cast %142 : vector<64xf32> to vector<64x1xf32>
    %cst_44 = arith.constant 6.400000e+01 : f32
    %144 = vector.broadcast %cst_44 : f32 to vector<64x1xf32>
    %145 = arith.divf %143, %144 : vector<64x1xf32>
    %146 = vector.broadcast %138 : vector<64x1xf32> to vector<64x64xf32>
    %147 = arith.subf %134, %146 : vector<64x64xf32>
    %cst_45 = arith.constant 9.99999974E-6 : f32
    %148 = vector.broadcast %cst_45 : f32 to vector<64x1xf32>
    %149 = arith.addf %145, %148 : vector<64x1xf32>
    %150 = math.rsqrt %149 : vector<64x1xf32>
    %151 = vector.broadcast %150 : vector<64x1xf32> to vector<64x64xf32>
    %152 = arith.mulf %147, %151 : vector<64x64xf32>
    %153 = arith.truncf %152 : vector<64x64xf32> to vector<64x64xbf16>
    %c0_46 = arith.constant 0 : index
    %c0_47 = arith.constant 0 : index
    %154 = vector.load %arg4[%c0_46, %c0_47] : memref<64x256xbf16, #tpu.memory_space<vmem>>, vector<64x256xbf16>
    %cst_48 = arith.constant dense<0.000000e+00> : vector<64x256xf32>
    %155 = tpu.matmul %153, %154, %cst_48 {dimension_numbers = #tpu.dot_dimension_numbers<[1], [0], [0], [1], [0, 0, 1, 1], [], []>} : vector<64x64xbf16>, vector<64x256xbf16>, vector<64x256xf32> -> vector<64x256xf32>
    %156 = vector.extract_strided_slice %0 {offsets = [3, 0], sizes = [1, 256], strides = [1, 1]} : vector<8x256xf32> to vector<1x256xf32>
    %157 = vector.broadcast %156 : vector<1x256xf32> to vector<64x256xf32>
    %158 = arith.addf %155, %157 : vector<64x256xf32>
    %159 = arith.mulf %158, %158 : vector<64x256xf32>
    %160 = arith.mulf %158, %159 : vector<64x256xf32>
    %cst_49 = arith.constant 4.471500e-02 : f32
    %161 = vector.broadcast %cst_49 : f32 to vector<64x256xf32>
    %162 = arith.mulf %161, %160 : vector<64x256xf32>
    %163 = arith.addf %158, %162 : vector<64x256xf32>
    %cst_50 = arith.constant 0.797884583 : f32
    %164 = vector.broadcast %cst_50 : f32 to vector<64x256xf32>
    %165 = arith.mulf %164, %163 : vector<64x256xf32>
    %166 = math.tanh %165 : vector<64x256xf32>
    %cst_51 = arith.constant 1.000000e+00 : f32
    %167 = vector.broadcast %cst_51 : f32 to vector<64x256xf32>
    %168 = arith.addf %167, %166 : vector<64x256xf32>
    %cst_52 = arith.constant 5.000000e-01 : f32
    %169 = vector.broadcast %cst_52 : f32 to vector<64x256xf32>
    %170 = arith.mulf %169, %168 : vector<64x256xf32>
    %171 = arith.mulf %158, %170 : vector<64x256xf32>
    %172 = arith.truncf %171 : vector<64x256xf32> to vector<64x256xbf16>
    %c0_53 = arith.constant 0 : index
    %c0_54 = arith.constant 0 : index
    %173 = vector.load %arg5[%c0_53, %c0_54] : memref<256x64xbf16, #tpu.memory_space<vmem>>, vector<256x64xbf16>
    %cst_55 = arith.constant dense<0.000000e+00> : vector<64x64xf32>
    %174 = tpu.matmul %172, %173, %cst_55 {dimension_numbers = #tpu.dot_dimension_numbers<[1], [0], [0], [1], [0, 0, 1, 1], [], []>} : vector<64x256xbf16>, vector<256x64xbf16>, vector<64x64xf32> -> vector<64x64xf32>
    %175 = arith.addf %134, %174 : vector<64x64xf32>
    %176 = vector.extract_strided_slice %0 {offsets = [4, 0], sizes = [1, 64], strides = [1, 1]} : vector<8x256xf32> to vector<1x64xf32>
    %177 = vector.broadcast %176 : vector<1x64xf32> to vector<64x64xf32>
    %178 = arith.addf %175, %177 : vector<64x64xf32>
    %179 = arith.truncf %178 : vector<64x64xf32> to vector<64x64xbf16>
    %c0_56 = arith.constant 0 : index
    %c0_57 = arith.constant 0 : index
    %180 = vector.load %arg6[%c0_56, %c0_57] : memref<64x128xbf16, #tpu.memory_space<vmem>>, vector<64x128xbf16>
    %cst_58 = arith.constant dense<0.000000e+00> : vector<64x128xf32>
    %181 = tpu.matmul %179, %180, %cst_58 {dimension_numbers = #tpu.dot_dimension_numbers<[1], [0], [0], [1], [0, 0, 1, 1], [], []>} : vector<64x64xbf16>, vector<64x128xbf16>, vector<64x128xf32> -> vector<64x128xf32>
    %182 = vector.extract_strided_slice %0 {offsets = [5, 0], sizes = [1, 128], strides = [1, 1]} : vector<8x256xf32> to vector<1x128xf32>
    %183 = vector.broadcast %182 : vector<1x128xf32> to vector<64x128xf32>
    %184 = arith.addf %181, %183 : vector<64x128xf32>
    %c0_59 = arith.constant 0 : index
    %c0_60 = arith.constant 0 : index
    %185 = vector.load %arg8[%c0_59, %c0_60] : memref<64x128xf32, #tpu.memory_space<vmem>>, vector<64x128xf32>
    tpu.vector_store %arg8[%c0_59, %c0_60], %184 {strides = array<i32>} : memref<64x128xf32, #tpu.memory_space<vmem>>, vector<64x128xf32>,
    return
  }
}

</mosaic_0001>

<llo_original>
// kernel: model_forward.1
$region0: #{model_forward.1}
  #allocation0 [shape = 'u32[]', space=smem, size = 0x4, offset = 0x4, fixed_abs, tag = 'smem constant byte address 0x4 - core index']
  #allocation1 [shape = 'u32[72,128]{1,0:T(1,128)}', space=vmem, size = 0x9000, scoped, tag = 'internal scratch']
  %s0 = inlined_call_operand.vmem [shape: bf16[64,128], index: 0, kind: input, shape index: {}]
  %s1 = inlined_call_operand.vmem [shape: bf16[128,64], index: 1, kind: input, shape index: {}]
  %s2 = inlined_call_operand.vmem [shape: bf16[64,192], index: 2, kind: input, shape index: {}]
  %s3 = inlined_call_operand.vmem [shape: bf16[64,64], index: 3, kind: input, shape index: {}]
  %s4 = inlined_call_operand.vmem [shape: bf16[64,256], index: 4, kind: input, shape index: {}]
  %s5 = inlined_call_operand.vmem [shape: bf16[256,64], index: 5, kind: input, shape index: {}]
  %s6 = inlined_call_operand.vmem [shape: bf16[64,128], index: 6, kind: input, shape index: {}]
  %s7 = inlined_call_operand.vmem [shape: f32[8,256], index: 7, kind: input, shape index: {}]
  %s8 = inlined_call_operand.hbm [shape: f32[64,128], index: 8, kind: output, shape index: {}]
  %s9 = sld [smem:[#allocation0]]
  $region42: #{model_forward.1} parent=0
    _
  %s11 = ssub.s32 1, %s9
  %s12 = scalar_select 0, %s11, %s9
  $region1: #{model_forward.1} parent=0
    #allocation2 [shape = 'u8[32768]{0}', space=vmem, size = 0x8000, scoped, tag = 'output window, operand 0, single buffered']
    #allocation3 [shape = 's32[1]{0}', space=sflag, size = 0x4, scoped, tag = 'scoped memory for model_forward.1']
    %13 = vsyncpa [#allocation3], 0
    // Predicated region
    $region2: #{model_forward.1} parent=1 // pred_check
      _
    $region3: #{model_forward.1} parent=1 // pred_check_branch
      %15 = sbr.rel (0) target = $region5
    $region4: #{model_forward.1} parent=1 // pred_region
      _
    $region5: #{model_forward.1} parent=1 // pred_fallthru
      _
    // Predicated region
    $region6: #{model_forward.1} parent=1 // pred_check
      _
    $region7: #{model_forward.1} parent=1 // pred_check_branch
      %17 = sbr.rel (0) target = $region9
    $region8: #{model_forward.1} parent=1 // pred_region
      _
    $region9: #{model_forward.1} parent=1 // pred_fallthru
      _
    // Predicated region
    $region10: #{model_forward.1} parent=1 // pred_check
      _
    $region11: #{model_forward.1} parent=1 // pred_check_branch
      %19 = sbr.rel (0) target = $region13
    $region12: #{model_forward.1} parent=1 // pred_region
      _
    $region13: #{model_forward.1} parent=1 // pred_fallthru
      _
    // Predicated region
    $region14: #{model_forward.1} parent=1 // pred_check
      _
    $region15: #{model_forward.1} parent=1 // pred_check_branch
      %21 = sbr.rel (0) target = $region17
    $region16: #{model_forward.1} parent=1 // pred_region
      _
    $region17: #{model_forward.1} parent=1 // pred_fallthru
      _
    // Predicated region
    $region18: #{model_forward.1} parent=1 // pred_check
      _
    $region19: #{model_forward.1} parent=1 // pred_check_branch
      %23 = sbr.rel (0) target = $region21
    $region20: #{model_forward.1} parent=1 // pred_region
      _
    $region21: #{model_forward.1} parent=1 // pred_fallthru
      _
    // Predicated region
    $region22: #{model_forward.1} parent=1 // pred_check
      _
    $region23: #{model_forward.1} parent=1 // pred_check_branch
      %25 = sbr.rel (0) target = $region25
    $region24: #{model_forward.1} parent=1 // pred_region
      _
    $region25: #{model_forward.1} parent=1 // pred_fallthru
      _
    // Predicated region
    $region26: #{model_forward.1} parent=1 // pred_check
      _
    $region27: #{model_forward.1} parent=1 // pred_check_branch
      %27 = sbr.rel (0) target = $region29
    $region28: #{model_forward.1} parent=1 // pred_region
      _
    $region29: #{model_forward.1} parent=1 // pred_fallthru
      _
    // Predicated region
    $region30: #{model_forward.1} parent=1 // pred_check
      _
    $region31: #{model_forward.1} parent=1 // pred_check_branch
      %29 = sbr.rel (0) target = $region33
    $region32: #{model_forward.1} parent=1 // pred_region
      _
    $region33: #{model_forward.1} parent=1 // pred_fallthru
      _
    %v31 = vld [vmem:[%s7] sm:$0xff]
    %v32 = vld [vmem:[%s7 + $0x8] sm:$0xff]
    %v33 = vld [vmem:[%s0] sm:$0xf]
    %v34 = vld [vmem:[%s0 + $0x4] sm:$0xf]
    %v35 = vld [vmem:[%s0 + $0x8] sm:$0xf]
    %v36 = vld [vmem:[%s0 + $0xc] sm:$0xf]
    %v37 = vld [vmem:[%s0 + $0x10] sm:$0xf]
    %v38 = vld [vmem:[%s0 + $0x14] sm:$0xf]
    %v39 = vld [vmem:[%s0 + $0x18] sm:$0xf]
    %v40 = vld [vmem:[%s0 + $0x1c] sm:$0xf]
    %v41 = vld [vmem:[%s1] sm:$0xf]
    %v42 = vld [vmem:[%s1 + $0x4] sm:$0xf]
    %v43 = vld [vmem:[%s1 + $0x8] sm:$0xf]
    %v44 = vld [vmem:[%s1 + $0xc] sm:$0xf]
    %v45 = vld [vmem:[%s1 + $0x10] sm:$0xf]
    %v46 = vld [vmem:[%s1 + $0x14] sm:$0xf]
    %v47 = vld [vmem:[%s1 + $0x18] sm:$0xf]
    %v48 = vld [vmem:[%s1 + $0x1c] sm:$0xf]
    %v49 = vld [vmem:[%s1 + $0x20] sm:$0xf]
    %v50 = vld [vmem:[%s1 + $0x24] sm:$0xf]
    %v51 = vld [vmem:[%s1 + $0x28] sm:$0xf]
    %v52 = vld [vmem:[%s1 + $0x2c] sm:$0xf]
    %v53 = vld [vmem:[%s1 + $0x30] sm:$0xf]
    %v54 = vld [vmem:[%s1 + $0x34] sm:$0xf]
    %v55 = vld [vmem:[%s1 + $0x38] sm:$0xf]
    %v56 = vld [vmem:[%s1 + $0x3c] sm:$0xf]
    %v57 = vperm.slane %v31, 0
    %v66 = vunpack.c.l.b16 %v33
    %v67 = vunpack.c.l.b16 %v34
    %v68 = vunpack.c.l.b16 %v35
    %v69 = vunpack.c.l.b16 %v36
    %v70 = vunpack.c.l.b16 %v37
    %v71 = vunpack.c.l.b16 %v38
    %v72 = vunpack.c.l.b16 %v39
    %v73 = vunpack.c.l.b16 %v40
    %v74 = vpack.c.b16 %v67, %v66
    %v75 = vpack.c.b16 %v69, %v68
    %v76 = vpack.c.b16 %v71, %v70
    %v77 = vpack.c.b16 %v73, %v72
    %v98 = vunpack.c.l.b16 %v41
    %v99 = vunpack.c.l.b16 %v42
    %v100 = vunpack.c.l.b16 %v43
    %v101 = vunpack.c.l.b16 %v44
    %v102 = vunpack.c.l.b16 %v45
    %v103 = vunpack.c.l.b16 %v46
    %v104 = vunpack.c.l.b16 %v47
    %v105 = vunpack.c.l.b16 %v48
    %v106 = vunpack.c.l.b16 %v49
    %v107 = vunpack.c.l.b16 %v50
    %v108 = vunpack.c.l.b16 %v51
    %v109 = vunpack.c.l.b16 %v52
    %v110 = vunpack.c.l.b16 %v53
    %v111 = vunpack.c.l.b16 %v54
    %v112 = vunpack.c.l.b16 %v55
    %v113 = vunpack.c.l.b16 %v56
    %v114 = vpack.c.b16 %v99, %v98
    %v115 = vpack.c.b16 %v101, %v100
    %v116 = vpack.c.b16 %v103, %v102
    %v117 = vpack.c.b16 %v105, %v104
    %v118 = vpack.c.b16 %v107, %v106
    %v119 = vpack.c.b16 %v109, %v108
    %v120 = vpack.c.b16 %v111, %v110
    %v121 = vpack.c.b16 %v113, %v112
    %130 = vmatpush.bf16.msra.mxu0 %v121
    %131 = vmatpush.bf16.msra.mxu0 %v120
    %132 = vmatpush.bf16.msra.mxu0 %v119
    %133 = vmatpush.bf16.msra.mxu0 %v118
    %134 = vmatpush.bf16.msra.mxu0 %v117
    %135 = vmatpush.bf16.msra.mxu0 %v116
    %136 = vmatpush.bf16.msra.mxu0 %v115
    %137 = vmatpush.bf16.msra.mxu0 %v114
    %138 = vmatmul.bf16.gmra.mxu0 %v74
    %v139 = vpop.f32.mrf.mxu0
    %v140 = vadd.f32 %v57, %v139
    %v141 = vpop.f32.mrf.mxu0
    %v142 = vadd.f32 %v57, %v141
    %143 = vmatmul.bf16.gmra.mxu0 %v75
    %v144 = vpop.f32.mrf.mxu0
    %v145 = vadd.f32 %v57, %v144
    %v146 = vpop.f32.mrf.mxu0
    %v147 = vadd.f32 %v57, %v146
    %148 = vmatmul.bf16.gmra.mxu0 %v76
    %v149 = vpop.f32.mrf.mxu0
    %v150 = vadd.f32 %v57, %v149
    %v151 = vpop.f32.mrf.mxu0
    %v152 = vadd.f32 %v57, %v151
    %153 = vmatmul.bf16.gmra.mxu0 %v77
    %v154 = vpop.f32.mrf.mxu0
    %v155 = vadd.f32 %v57, %v154
    %v156 = vpop.f32.mrf.mxu0
    %v157 = vadd.f32 %v57, %v156
    %158 = vdwg.mxu0
    %vm159 = vcmask 523264
    %v160 = vsel %vm159, %v140, 0.0
    %161 = vadd.xlane.f32.xlu0 %v160
    %v162 = vpop.xlane.xlu0 %161
    %v163 = vsel %vm159, %v142, 0.0
    %164 = vadd.xlane.f32.xlu0 %v163
    %v165 = vpop.xlane.xlu0 %164
    %v166 = vsel %vm159, %v145, 0.0
    %167 = vadd.xlane.f32.xlu0 %v166
    %v168 = vpop.xlane.xlu0 %167
    %v169 = vsel %vm159, %v147, 0.0
    %170 = vadd.xlane.f32.xlu0 %v169
    %v171 = vpop.xlane.xlu0 %170
    %v172 = vsel %vm159, %v150, 0.0
    %173 = vadd.xlane.f32.xlu0 %v172
    %v174 = vpop.xlane.xlu0 %173
    %v175 = vsel %vm159, %v152, 0.0
    %176 = vadd.xlane.f32.xlu0 %v175
    %v177 = vpop.xlane.xlu0 %176
    %v178 = vsel %vm159, %v155, 0.0
    %179 = vadd.xlane.f32.xlu0 %v178
    %v180 = vpop.xlane.xlu0 %179
    %v181 = vsel %vm159, %v157, 0.0
    %182 = vadd.xlane.f32.xlu0 %v181
    %v183 = vpop.xlane.xlu0 %182
    %v184 = vrcp.pop 64.0
    %v185 = vmul.f32 64.0, %v184
    %v186 = vsub.f32 1.0, %v185
    %v187 = vmul.f32 %v184, %v186
    %v188 = vadd.f32 %v184, %v187
    %vm189 = vweird.f32 %v184
    %v190 = vsel %vm189, %v184, %v188
    %v191 = vmul.f32 %v162, %v190
    %v192 = vmul.f32 %v165, %v190
    %v193 = vmul.f32 %v168, %v190
    %v194 = vmul.f32 %v171, %v190
    %v195 = vmul.f32 %v174, %v190
    %v196 = vmul.f32 %v177, %v190
    %v197 = vmul.f32 %v180, %v190
    %v198 = vmul.f32 %v183, %v190
    %v199 = vsub.f32 %v140, %v191
    %v200 = vsub.f32 %v142, %v192
    %v201 = vsub.f32 %v145, %v193
    %v202 = vsub.f32 %v147, %v194
    %v203 = vsub.f32 %v150, %v195
    %v204 = vsub.f32 %v152, %v196
    %v205 = vsub.f32 %v155, %v197
    %v206 = vsub.f32 %v157, %v198
    %v207 = vmul.f32 %v199, %v199
    %v208 = vmul.f32 %v200, %v200
    %v209 = vmul.f32 %v201, %v201
    %v210 = vmul.f32 %v202, %v202
    %v211 = vmul.f32 %v203, %v203
    %v212 = vmul.f32 %v204, %v204
    %v213 = vmul.f32 %v205, %v205
    %v214 = vmul.f32 %v206, %v206
    %v215 = vsel %vm159, %v207, 0.0
    %216 = vadd.xlane.f32.xlu0 %v215
    %v217 = vpop.xlane.xlu0 %216
    %v218 = vsel %vm159, %v208, 0.0
    %219 = vadd.xlane.f32.xlu0 %v218
    %v220 = vpop.xlane.xlu0 %219
    %v221 = vsel %vm159, %v209, 0.0
    %222 = vadd.xlane.f32.xlu0 %v221
    %v223 = vpop.xlane.xlu0 %222
    %v224 = vsel %vm159, %v210, 0.0
    %225 = vadd.xlane.f32.xlu0 %v224
    %v226 = vpop.xlane.xlu0 %225
    %v227 = vsel %vm159, %v211, 0.0
    %228 = vadd.xlane.f32.xlu0 %v227
    %v229 = vpop.xlane.xlu0 %228
    %v230 = vsel %vm159, %v212, 0.0
    %231 = vadd.xlane.f32.xlu0 %v230
    %v232 = vpop.xlane.xlu0 %231
    %v233 = vsel %vm159, %v213, 0.0
    %234 = vadd.xlane.f32.xlu0 %v233
    %v235 = vpop.xlane.xlu0 %234
    %v236 = vsel %vm159, %v214, 0.0
    %237 = vadd.xlane.f32.xlu0 %v236
    %v238 = vpop.xlane.xlu0 %237
    %v239 = vmul.f32 %v217, %v190
    %v240 = vmul.f32 %v220, %v190
    %v241 = vmul.f32 %v223, %v190
    %v242 = vmul.f32 %v226, %v190
    %v243 = vmul.f32 %v229, %v190
    %v244 = vmul.f32 %v232, %v190
    %v245 = vmul.f32 %v235, %v190
    %v246 = vmul.f32 %v238, %v190
    %v247 = vadd.f32 %v239, 1e-05
    %v248 = vadd.f32 %v240, 1e-05
    %v249 = vadd.f32 %v241, 1e-05
    %v250 = vadd.f32 %v242, 1e-05
    %v251 = vadd.f32 %v243, 1e-05
    %v252 = vadd.f32 %v244, 1e-05
    %v253 = vadd.f32 %v245, 1e-05
    %v254 = vadd.f32 %v246, 1e-05
    %v255 = vrsqrt.pop %v247
    %v256 = vmul.f32 %v255, %v247
    %v257 = vmul.f32 %v256, %v255
    %v258 = vmul.f32 0.5, %v257
    %v259 = vsub.f32 1.5, %v258
    %v260 = vmul.f32 %v255, %v259
    %vm261 = vweird.f32 %v247
    %vm262 = vweird.f32 %v255
    %vm263 = vmor %vm261, %vm262
    %v264 = vsel %vm263, %v255, %v260
    %v265 = vrsqrt.pop %v248
    %v266 = vmul.f32 %v265, %v248
    %v267 = vmul.f32 %v266, %v265
    %v268 = vmul.f32 0.5, %v267
    %v269 = vsub.f32 1.5, %v268
    %v270 = vmul.f32 %v265, %v269
    %vm271 = vweird.f32 %v248
    %vm272 = vweird.f32 %v265
    %vm273 = vmor %vm271, %vm272
    %v274 = vsel %vm273, %v265, %v270
    %v275 = vrsqrt.pop %v249
    %v276 = vmul.f32 %v275, %v249
    %v277 = vmul.f32 %v276, %v275
    %v278 = vmul.f32 0.5, %v277
    %v279 = vsub.f32 1.5, %v278
    %v280 = vmul.f32 %v275, %v279
    %vm281 = vweird.f32 %v249
    %vm282 = vweird.f32 %v275
    %vm283 = vmor %vm281, %vm282
    %v284 = vsel %vm283, %v275, %v280
    %v285 = vrsqrt.pop %v250
    %v286 = vmul.f32 %v285, %v250
    %v287 = vmul.f32 %v286, %v285
    %v288 = vmul.f32 0.5, %v287
    %v289 = vsub.f32 1.5, %v288
    %v290 = vmul.f32 %v285, %v289
    %vm291 = vweird.f32 %v250
    %vm292 = vweird.f32 %v285
    %vm293 = vmor %vm291, %vm292
    %v294 = vsel %vm293, %v285, %v290
    %v295 = vrsqrt.pop %v251
    %v296 = vmul.f32 %v295, %v251
    %v297 = vmul.f32 %v296, %v295
    %v298 = vmul.f32 0.5, %v297
    %v299 = vsub.f32 1.5, %v298
    %v300 = vmul.f32 %v295, %v299
    %vm301 = vweird.f32 %v251
    %vm302 = vweird.f32 %v295
    %vm303 = vmor %vm301, %vm302
    %v304 = vsel %vm303, %v295, %v300
    %v305 = vrsqrt.pop %v252
    %v306 = vmul.f32 %v305, %v252
    %v307 = vmul.f32 %v306, %v305
    %v308 = vmul.f32 0.5, %v307
    %v309 = vsub.f32 1.5, %v308
    %v310 = vmul.f32 %v305, %v309
    %vm311 = vweird.f32 %v252
    %vm312 = vweird.f32 %v305
    %vm313 = vmor %vm311, %vm312
    %v314 = vsel %vm313, %v305, %v310
    %v315 = vrsqrt.pop %v253
    %v316 = vmul.f32 %v315, %v253
    %v317 = vmul.f32 %v316, %v315
    %v318 = vmul.f32 0.5, %v317
    %v319 = vsub.f32 1.5, %v318
    %v320 = vmul.f32 %v315, %v319
    %vm321 = vweird.f32 %v253
    %vm322 = vweird.f32 %v315
    %vm323 = vmor %vm321, %vm322
    %v324 = vsel %vm323, %v315, %v320
    %v325 = vrsqrt.pop %v254
    %v326 = vmul.f32 %v325, %v254
    %v327 = vmul.f32 %v326, %v325
    %v328 = vmul.f32 0.5, %v327
    %v329 = vsub.f32 1.5, %v328
    %v330 = vmul.f32 %v325, %v329
    %vm331 = vweird.f32 %v254
    %vm332 = vweird.f32 %v325
    %vm333 = vmor %vm331, %vm332
    %v334 = vsel %vm333, %v325, %v330
    %v335 = vmul.f32 %v199, %v264
    %v336 = vmul.f32 %v200, %v274
    %v337 = vmul.f32 %v201, %v284
    %v338 = vmul.f32 %v202, %v294
    %v339 = vmul.f32 %v203, %v304
    %v340 = vmul.f32 %v204, %v314
    %v341 = vmul.f32 %v205, %v324
    %v342 = vmul.f32 %v206, %v334
    %v343 = vpack.c.bf16 %v336, %v335
    %v344 = vpack.c.bf16 %v338, %v337
    %v345 = vpack.c.bf16 %v340, %v339
    %v346 = vpack.c.bf16 %v342, %v341
    %v347 = vld [vmem:[%s2] sm:$0xff]
    %v348 = vld [vmem:[%s2 + $0x8] sm:$0xff]
    %v349 = vld [vmem:[%s2 + $0x10] sm:$0xff]
    %v350 = vld [vmem:[%s2 + $0x18] sm:$0xff]
    %v351 = vld [vmem:[%s2 + $0x20] sm:$0xff]
    %v352 = vld [vmem:[%s2 + $0x28] sm:$0xff]
    %v353 = vld [vmem:[%s2 + $0x30] sm:$0xff]
    %v354 = vld [vmem:[%s2 + $0x38] sm:$0xff]
    %v355 = vperm.slane %v31, 1
    %v356 = vperm.slane %v32, 1
    %v365 = vunpack.c.l.b16 %v347
    %v366 = vunpack.c.h.b16 %v347
    %v367 = vunpack.c.l.b16 %v348
    %v368 = vunpack.c.h.b16 %v348
    %v369 = vunpack.c.l.b16 %v349
    %v370 = vunpack.c.h.b16 %v349
    %v371 = vunpack.c.l.b16 %v350
    %v372 = vunpack.c.h.b16 %v350
    %v373 = vunpack.c.l.b16 %v351
    %v374 = vunpack.c.h.b16 %v351
    %v375 = vunpack.c.l.b16 %v352
    %v376 = vunpack.c.h.b16 %v352
    %v377 = vunpack.c.l.b16 %v353
    %v378 = vunpack.c.h.b16 %v353
    %v379 = vunpack.c.l.b16 %v354
    %v380 = vunpack.c.h.b16 %v354
    %v381 = vpack.c.b16 %v367, %v365
    %v382 = vpack.c.b16 %v368, %v366
    %v383 = vpack.c.b16 %v371, %v369
    %v384 = vpack.c.b16 %v372, %v370
    %v385 = vpack.c.b16 %v375, %v373
    %v386 = vpack.c.b16 %v376, %v374
    %v387 = vpack.c.b16 %v379, %v377
    %v388 = vpack.c.b16 %v380, %v378
    %v398 = vsel %vm159, %v343, 0
    %v401 = vsel %vm159, %v344, 0
    %v404 = vsel %vm159, %v345, 0
    %v407 = vsel %vm159, %v346, 0
    %409 = vmatpush.bf16.msra.mxu0 0
    %410 = vmatpush.bf16.msra.mxu0 0
    %411 = vmatpush.bf16.msra.mxu0 0
    %412 = vmatpush.bf16.msra.mxu0 0
    %413 = vmatpush.bf16.msra.mxu0 %v387
    %414 = vmatpush.bf16.msra.mxu0 %v385
    %415 = vmatpush.bf16.msra.mxu0 %v383
    %416 = vmatpush.bf16.msra.mxu0 %v381
    %417 = vmatmul.bf16.gmra.mxu0 %v398
    %v418 = vpop.f32.mrf.mxu0
    %v419 = vadd.f32 %v355, %v418
    %v420 = vpop.f32.mrf.mxu0
    %v421 = vadd.f32 %v355, %v420
    %422 = vmatmul.bf16.gmra.mxu0 %v401
    %v423 = vpop.f32.mrf.mxu0
    %v424 = vadd.f32 %v355, %v423
    %v425 = vpop.f32.mrf.mxu0
    %v426 = vadd.f32 %v355, %v425
    %427 = vmatmul.bf16.gmra.mxu0 %v404
    %v428 = vpop.f32.mrf.mxu0
    %v429 = vadd.f32 %v355, %v428
    %v430 = vpop.f32.mrf.mxu0
    %v431 = vadd.f32 %v355, %v430
    %432 = vmatmul.bf16.gmra.mxu0 %v407
    %v433 = vpop.f32.mrf.mxu0
    %v434 = vadd.f32 %v355, %v433
    %v435 = vpop.f32.mrf.mxu0
    %v436 = vadd.f32 %v355, %v435
    %437 = vdwg.mxu0
    %438 = vmatpush.bf16.msra.mxu0 0
    %439 = vmatpush.bf16.msra.mxu0 0
    %440 = vmatpush.bf16.msra.mxu0 0
    %441 = vmatpush.bf16.msra.mxu0 0
    %442 = vmatpush.bf16.msra.mxu0 %v388
    %443 = vmatpush.bf16.msra.mxu0 %v386
    %444 = vmatpush.bf16.msra.mxu0 %v384
    %445 = vmatpush.bf16.msra.mxu0 %v382
    %446 = vmatmul.bf16.gmra.mxu0 %v398
    %v447 = vpop.f32.mrf.mxu0
    %v448 = vadd.f32 %v356, %v447
    %v449 = vpop.f32.mrf.mxu0
    %v450 = vadd.f32 %v356, %v449
    %451 = vmatmul.bf16.gmra.mxu0 %v401
    %v452 = vpop.f32.mrf.mxu0
    %v453 = vadd.f32 %v356, %v452
    %v454 = vpop.f32.mrf.mxu0
    %v455 = vadd.f32 %v356, %v454
    %456 = vmatmul.bf16.gmra.mxu0 %v404
    %v457 = vpop.f32.mrf.mxu0
    %v458 = vadd.f32 %v356, %v457
    %v459 = vpop.f32.mrf.mxu0
    %v460 = vadd.f32 %v356, %v459
    %461 = vmatmul.bf16.gmra.mxu0 %v407
    %v462 = vpop.f32.mrf.mxu0
    %v463 = vadd.f32 %v356, %v462
    %v464 = vpop.f32.mrf.mxu0
    %v465 = vadd.f32 %v356, %v464
    %466 = vdwg.mxu0
    %v467 = vld [vmem:[%s3] sm:$0xf]
    %v468 = vld [vmem:[%s3 + $0x4] sm:$0xf]
    %v469 = vld [vmem:[%s3 + $0x8] sm:$0xf]
    %v470 = vld [vmem:[%s3 + $0xc] sm:$0xf]
    %v471 = vld [vmem:[%s3 + $0x10] sm:$0xf]
    %v472 = vld [vmem:[%s3 + $0x14] sm:$0xf]
    %v473 = vld [vmem:[%s3 + $0x18] sm:$0xf]
    %v474 = vld [vmem:[%s3 + $0x1c] sm:$0xf]
    %v475 = vpack.c.bf16 %v421, %v419
    %v476 = vpack.c.bf16 %v426, %v424
    %v477 = vpack.c.bf16 %v450, %v448
    %v478 = vpack.c.bf16 %v455, %v453
    %481 = vrot.lane.b32.xlu0 %v475, 64
    %v482 = vpop.permute.xlu0 %481
    %483 = vrot.lane.b32.xlu0 %v476, 64
    %v484 = vpop.permute.xlu0 %483
    %vm485 = vcmask 261120
    %v487 = vsel %vm485, %v475, 0
    %v490 = vsel %vm485, %v476, 0
    %v493 = vsel %vm485, %v482, 0
    %v496 = vsel %vm485, %v484, 0
    %498 = vmatpush.bf16.xpose.msra.mxu0 0
    %499 = vmatpush.bf16.xpose.msra.mxu0 0
    %500 = vmatpush.bf16.xpose.msra.mxu0 0
    %501 = vmatpush.bf16.xpose.msra.mxu0 0
    %502 = vmatpush.bf16.xpose.msra.mxu0 0
    %503 = vmatpush.bf16.xpose.msra.mxu0 0
    %504 = vmatpush.bf16.xpose.msra.mxu0 %v496
    %505 = vmatpush.bf16.xpose.msra.mxu0 %v493
    %506 = vmatmul.bf16.gmra.mxu0 %v487
    %v507 = vpop.f32.mrf.mxu0
    %v508 = vadd.f32 0.0, %v507
    %v509 = vpop.f32.mrf.mxu0
    %v510 = vadd.f32 0.0, %v509
    %511 = vmatmul.bf16.gmra.mxu0 %v490
    %v512 = vpop.f32.mrf.mxu0
    %v513 = vadd.f32 0.0, %v512
    %v514 = vpop.f32.mrf.mxu0
    %v515 = vadd.f32 0.0, %v514
    %516 = vdwg.mxu0
    %v517 = vmul.f32 %v508, 0.17677669
    %v518 = vmul.f32 %v510, 0.17677669
    %v519 = vmul.f32 %v513, 0.17677669
    %v520 = vmul.f32 %v515, 0.17677669
    %v521 = vsel %vm485, %v517, -inf
    %522 = vmax.xlane.f32.xlu0 %v521
    %v523 = vpop.xlane.xlu0 %522
    %v524 = vsel %vm485, %v518, -inf
    %525 = vmax.xlane.f32.xlu0 %v524
    %v526 = vpop.xlane.xlu0 %525
    %v527 = vsel %vm485, %v519, -inf
    %528 = vmax.xlane.f32.xlu0 %v527
    %v529 = vpop.xlane.xlu0 %528
    %v530 = vsel %vm485, %v520, -inf
    %531 = vmax.xlane.f32.xlu0 %v530
    %v532 = vpop.xlane.xlu0 %531
    %v533 = vsub.f32 %v517, %v523
    %v534 = vsub.f32 %v518, %v526
    %v535 = vsub.f32 %v519, %v529
    %v536 = vsub.f32 %v520, %v532
    %v537 = vmul.f32 %v533, 1.442695
    %v538 = vpow.pop %v537
    %v539 = vmul.f32 %v534, 1.442695
    %v540 = vpow.pop %v539
    %v541 = vmul.f32 %v535, 1.442695
    %v542 = vpow.pop %v541
    %v543 = vmul.f32 %v536, 1.442695
    %v544 = vpow.pop %v543
    %v545 = vsel %vm485, %v538, 0.0
    %546 = vadd.xlane.f32.xlu0 %v545
    %v547 = vpop.xlane.xlu0 %546
    %v548 = vsel %vm485, %v540, 0.0
    %549 = vadd.xlane.f32.xlu0 %v548
    %v550 = vpop.xlane.xlu0 %549
    %v551 = vsel %vm485, %v542, 0.0
    %552 = vadd.xlane.f32.xlu0 %v551
    %v553 = vpop.xlane.xlu0 %552
    %v554 = vsel %vm485, %v544, 0.0
    %555 = vadd.xlane.f32.xlu0 %v554
    %v556 = vpop.xlane.xlu0 %555
    %v557 = vrcp.pop %v547
    %v558 = vmul.f32 %v547, %v557
    %v559 = vsub.f32 1.0, %v558
    %v560 = vmul.f32 %v557, %v559
    %v561 = vadd.f32 %v557, %v560
    %vm562 = vweird.f32 %v547
    %vm563 = vweird.f32 %v557
    %vm564 = vmor %vm562, %vm563
    %v565 = vsel %vm564, %v557, %v561
    %v566 = vand.u32 2147483647, %v547
    %vm567 = vcmp.eq.f32.partialorder %v566, 8.507059e+37
    %v568 = vand.u32 %v547, 2147483648
    %v569 = vor.u32 1.1754944e-38, %v568
    %v570 = vsel %vm567, %v569, %v565
    %v571 = vmul.f32 %v538, %v570
    %v572 = vrcp.pop %v550
    %v573 = vmul.f32 %v550, %v572
    %v574 = vsub.f32 1.0, %v573
    %v575 = vmul.f32 %v572, %v574
    %v576 = vadd.f32 %v572, %v575
    %vm577 = vweird.f32 %v550
    %vm578 = vweird.f32 %v572
    %vm579 = vmor %vm577, %vm578
    %v580 = vsel %vm579, %v572, %v576
    %v581 = vand.u32 2147483647, %v550
    %vm582 = vcmp.eq.f32.partialorder %v581, 8.507059e+37
    %v583 = vand.u32 %v550, 2147483648
    %v584 = vor.u32 1.1754944e-38, %v583
    %v585 = vsel %vm582, %v584, %v580
    %v586 = vmul.f32 %v540, %v585
    %v587 = vrcp.pop %v553
    %v588 = vmul.f32 %v553, %v587
    %v589 = vsub.f32 1.0, %v588
    %v590 = vmul.f32 %v587, %v589
    %v591 = vadd.f32 %v587, %v590
    %vm592 = vweird.f32 %v553
    %vm593 = vweird.f32 %v587
    %vm594 = vmor %vm592, %vm593
    %v595 = vsel %vm594, %v587, %v591
    %v596 = vand.u32 2147483647, %v553
    %vm597 = vcmp.eq.f32.partialorder %v596, 8.507059e+37
    %v598 = vand.u32 %v553, 2147483648
    %v599 = vor.u32 1.1754944e-38, %v598
    %v600 = vsel %vm597, %v599, %v595
    %v601 = vmul.f32 %v542, %v600
    %v602 = vrcp.pop %v556
    %v603 = vmul.f32 %v556, %v602
    %v604 = vsub.f32 1.0, %v603
    %v605 = vmul.f32 %v602, %v604
    %v606 = vadd.f32 %v602, %v605
    %vm607 = vweird.f32 %v556
    %vm608 = vweird.f32 %v602
    %vm609 = vmor %vm607, %vm608
    %v610 = vsel %vm609, %v602, %v606
    %v611 = vand.u32 2147483647, %v556
    %vm612 = vcmp.eq.f32.partialorder %v611, 8.507059e+37
    %v613 = vand.u32 %v556, 2147483648
    %v614 = vor.u32 1.1754944e-38, %v613
    %v615 = vsel %vm612, %v614, %v610
    %v616 = vmul.f32 %v544, %v615
    %v617 = vpack.c.bf16 %v586, %v571
    %v618 = vpack.c.bf16 %v616, %v601
    %v620 = vsel %vm485, %v617, 0
    %v623 = vsel %vm485, %v618, 0
    %625 = vmatpush.bf16.msra.mxu0 0
    %626 = vmatpush.bf16.msra.mxu0 0
    %627 = vmatpush.bf16.msra.mxu0 0
    %628 = vmatpush.bf16.msra.mxu0 0
    %629 = vmatpush.bf16.msra.mxu0 0
    %630 = vmatpush.bf16.msra.mxu0 0
    %631 = vmatpush.bf16.msra.mxu0 %v478
    %632 = vmatpush.bf16.msra.mxu0 %v477
    %633 = vmatmul.bf16.gmra.mxu0 %v620
    %v634 = vpop.f32.mrf.mxu0
    %v635 = vadd.f32 0.0, %v634
    %v636 = vpop.f32.mrf.mxu0
    %v637 = vadd.f32 0.0, %v636
    %638 = vmatmul.bf16.gmra.mxu0 %v623
    %v639 = vpop.f32.mrf.mxu0
    %v640 = vadd.f32 0.0, %v639
    %v641 = vpop.f32.mrf.mxu0
    %v642 = vadd.f32 0.0, %v641
    %643 = vdwg.mxu0
    %v644 = vpack.c.bf16 %v637, %v635
    %v645 = vpack.c.bf16 %v642, %v640
    %646 = vrot.lane.b32.xlu0 %v475, 96
    %v647 = vpop.permute.xlu0 %646
    %648 = vrot.lane.b32.xlu0 %v476, 96
    %v649 = vpop.permute.xlu0 %648
    %650 = vrot.lane.b32.xlu0 %v475, 32
    %v651 = vpop.permute.xlu0 %650
    %652 = vrot.lane.b32.xlu0 %v476, 32
    %v653 = vpop.permute.xlu0 %652
    %v655 = vsel %vm485, %v647, 0
    %v658 = vsel %vm485, %v649, 0
    %v661 = vsel %vm485, %v651, 0
    %v664 = vsel %vm485, %v653, 0
    %666 = vmatpush.bf16.xpose.msra.mxu0 0
    %667 = vmatpush.bf16.xpose.msra.mxu0 0
    %668 = vmatpush.bf16.xpose.msra.mxu0 0
    %669 = vmatpush.bf16.xpose.msra.mxu0 0
    %670 = vmatpush.bf16.xpose.msra.mxu0 0
    %671 = vmatpush.bf16.xpose.msra.mxu0 0
    %672 = vmatpush.bf16.xpose.msra.mxu0 %v664
    %673 = vmatpush.bf16.xpose.msra.mxu0 %v661
    %674 = vmatmul.bf16.gmra.mxu0 %v655
    %v675 = vpop.f32.mrf.mxu0
    %v676 = vadd.f32 0.0, %v675
    %v677 = vpop.f32.mrf.mxu0
    %v678 = vadd.f32 0.0, %v677
    %679 = vmatmul.bf16.gmra.mxu0 %v658
    %v680 = vpop.f32.mrf.mxu0
    %v681 = vadd.f32 0.0, %v680
    %v682 = vpop.f32.mrf.mxu0
    %v683 = vadd.f32 0.0, %v682
    %684 = vdwg.mxu0
    %v685 = vmul.f32 %v676, 0.17677669
    %v686 = vmul.f32 %v678, 0.17677669
    %v687 = vmul.f32 %v681, 0.17677669
    %v688 = vmul.f32 %v683, 0.17677669
    %v689 = vsel %vm485, %v685, -inf
    %690 = vmax.xlane.f32.xlu0 %v689
    %v691 = vpop.xlane.xlu0 %690
    %v692 = vsel %vm485, %v686, -inf
    %693 = vmax.xlane.f32.xlu0 %v692
    %v694 = vpop.xlane.xlu0 %693
    %v695 = vsel %vm485, %v687, -inf
    %696 = vmax.xlane.f32.xlu0 %v695
    %v697 = vpop.xlane.xlu0 %696
    %v698 = vsel %vm485, %v688, -inf
    %699 = vmax.xlane.f32.xlu0 %v698
    %v700 = vpop.xlane.xlu0 %699
    %v701 = vsub.f32 %v685, %v691
    %v702 = vsub.f32 %v686, %v694
    %v703 = vsub.f32 %v687, %v697
    %v704 = vsub.f32 %v688, %v700
    %v705 = vmul.f32 %v701, 1.442695
    %v706 = vpow.pop %v705
    %v707 = vmul.f32 %v702, 1.442695
    %v708 = vpow.pop %v707
    %v709 = vmul.f32 %v703, 1.442695
    %v710 = vpow.pop %v709
    %v711 = vmul.f32 %v704, 1.442695
    %v712 = vpow.pop %v711
    %v713 = vsel %vm485, %v706, 0.0
    %714 = vadd.xlane.f32.xlu0 %v713
    %v715 = vpop.xlane.xlu0 %714
    %v716 = vsel %vm485, %v708, 0.0
    %717 = vadd.xlane.f32.xlu0 %v716
    %v718 = vpop.xlane.xlu0 %717
    %v719 = vsel %vm485, %v710, 0.0
    %720 = vadd.xlane.f32.xlu0 %v719
    %v721 = vpop.xlane.xlu0 %720
    %v722 = vsel %vm485, %v712, 0.0
    %723 = vadd.xlane.f32.xlu0 %v722
    %v724 = vpop.xlane.xlu0 %723
    %v725 = vrcp.pop %v715
    %v726 = vmul.f32 %v715, %v725
    %v727 = vsub.f32 1.0, %v726
    %v728 = vmul.f32 %v725, %v727
    %v729 = vadd.f32 %v725, %v728
    %vm730 = vweird.f32 %v715
    %vm731 = vweird.f32 %v725
    %vm732 = vmor %vm730, %vm731
    %v733 = vsel %vm732, %v725, %v729
    %v734 = vand.u32 2147483647, %v715
    %vm735 = vcmp.eq.f32.partialorder %v734, 8.507059e+37
    %v736 = vand.u32 %v715, 2147483648
    %v737 = vor.u32 1.1754944e-38, %v736
    %v738 = vsel %vm735, %v737, %v733
    %v739 = vmul.f32 %v706, %v738
    %v740 = vrcp.pop %v718
    %v741 = vmul.f32 %v718, %v740
    %v742 = vsub.f32 1.0, %v741
    %v743 = vmul.f32 %v740, %v742
    %v744 = vadd.f32 %v740, %v743
    %vm745 = vweird.f32 %v718
    %vm746 = vweird.f32 %v740
    %vm747 = vmor %vm745, %vm746
    %v748 = vsel %vm747, %v740, %v744
    %v749 = vand.u32 2147483647, %v718
    %vm750 = vcmp.eq.f32.partialorder %v749, 8.507059e+37
    %v751 = vand.u32 %v718, 2147483648
    %v752 = vor.u32 1.1754944e-38, %v751
    %v753 = vsel %vm750, %v752, %v748
    %v754 = vmul.f32 %v708, %v753
    %v755 = vrcp.pop %v721
    %v756 = vmul.f32 %v721, %v755
    %v757 = vsub.f32 1.0, %v756
    %v758 = vmul.f32 %v755, %v757
    %v759 = vadd.f32 %v755, %v758
    %vm760 = vweird.f32 %v721
    %vm761 = vweird.f32 %v755
    %vm762 = vmor %vm760, %vm761
    %v763 = vsel %vm762, %v755, %v759
    %v764 = vand.u32 2147483647, %v721
    %vm765 = vcmp.eq.f32.partialorder %v764, 8.507059e+37
    %v766 = vand.u32 %v721, 2147483648
    %v767 = vor.u32 1.1754944e-38, %v766
    %v768 = vsel %vm765, %v767, %v763
    %v769 = vmul.f32 %v710, %v768
    %v770 = vrcp.pop %v724
    %v771 = vmul.f32 %v724, %v770
    %v772 = vsub.f32 1.0, %v771
    %v773 = vmul.f32 %v770, %v772
    %v774 = vadd.f32 %v770, %v773
    %vm775 = vweird.f32 %v724
    %vm776 = vweird.f32 %v770
    %vm777 = vmor %vm775, %vm776
    %v778 = vsel %vm777, %v770, %v774
    %v779 = vand.u32 2147483647, %v724
    %vm780 = vcmp.eq.f32.partialorder %v779, 8.507059e+37
    %v781 = vand.u32 %v724, 2147483648
    %v782 = vor.u32 1.1754944e-38, %v781
    %v783 = vsel %vm780, %v782, %v778
    %v784 = vmul.f32 %v712, %v783
    %v785 = vpack.c.bf16 %v754, %v739
    %v786 = vpack.c.bf16 %v784, %v769
    %789 = vrot.lane.b32.xlu0 %v477, 96
    %v790 = vpop.permute.xlu0 %789
    %791 = vrot.lane.b32.xlu0 %v478, 96
    %v792 = vpop.permute.xlu0 %791
    %v796 = vsel %vm485, %v785, 0
    %v799 = vsel %vm485, %v786, 0
    %801 = vmatpush.bf16.msra.mxu0 0
    %802 = vmatpush.bf16.msra.mxu0 0
    %803 = vmatpush.bf16.msra.mxu0 0
    %804 = vmatpush.bf16.msra.mxu0 0
    %805 = vmatpush.bf16.msra.mxu0 0
    %806 = vmatpush.bf16.msra.mxu0 0
    %807 = vmatpush.bf16.msra.mxu0 %v792
    %808 = vmatpush.bf16.msra.mxu0 %v790
    %809 = vmatmul.bf16.gmra.mxu0 %v796
    %v810 = vpop.f32.mrf.mxu0
    %v811 = vadd.f32 0.0, %v810
    %v812 = vpop.f32.mrf.mxu0
    %v813 = vadd.f32 0.0, %v812
    %814 = vmatmul.bf16.gmra.mxu0 %v799
    %v815 = vpop.f32.mrf.mxu0
    %v816 = vadd.f32 0.0, %v815
    %v817 = vpop.f32.mrf.mxu0
    %v818 = vadd.f32 0.0, %v817
    %819 = vdwg.mxu0
    %v820 = vpack.c.bf16 %v813, %v811
    %v821 = vpack.c.bf16 %v818, %v816
    %v826 = vunpack.c.l.b16 %v471
    %v827 = vunpack.c.l.b16 %v472
    %v828 = vunpack.c.l.b16 %v473
    %v829 = vunpack.c.l.b16 %v474
    %v830 = vpack.c.b16 %v827, %v826
    %v831 = vpack.c.b16 %v829, %v828
    %v835 = vsel %vm485, %v820, 0
    %v838 = vsel %vm485, %v821, 0
    %840 = vmatpush.bf16.msra.mxu0 0
    %841 = vmatpush.bf16.msra.mxu0 0
    %842 = vmatpush.bf16.msra.mxu0 0
    %843 = vmatpush.bf16.msra.mxu0 0
    %844 = vmatpush.bf16.msra.mxu0 0
    %845 = vmatpush.bf16.msra.mxu0 0
    %846 = vmatpush.bf16.msra.mxu0 %v831
    %847 = vmatpush.bf16.msra.mxu0 %v830
    %848 = vmatmul.bf16.gmra.mxu0 %v835
    %v849 = vpop.f32.mrf.mxu0
    %v850 = vadd.f32 0.0, %v849
    %v851 = vpop.f32.mrf.mxu0
    %v852 = vadd.f32 0.0, %v851
    %853 = vmatmul.bf16.gmra.mxu0 %v838
    %v854 = vpop.f32.mrf.mxu0
    %v855 = vadd.f32 0.0, %v854
    %v856 = vpop.f32.mrf.mxu0
    %v857 = vadd.f32 0.0, %v856
    %858 = vdwg.mxu0
    %v863 = vunpack.c.l.b16 %v467
    %v864 = vunpack.c.l.b16 %v468
    %v865 = vunpack.c.l.b16 %v469
    %v866 = vunpack.c.l.b16 %v470
    %v867 = vpack.c.b16 %v864, %v863
    %v868 = vpack.c.b16 %v866, %v865
    %v872 = vsel %vm485, %v644, 0
    %v875 = vsel %vm485, %v645, 0
    %877 = vmatpush.bf16.msra.mxu0 0
    %878 = vmatpush.bf16.msra.mxu0 0
    %879 = vmatpush.bf16.msra.mxu0 0
    %880 = vmatpush.bf16.msra.mxu0 0
    %881 = vmatpush.bf16.msra.mxu0 0
    %882 = vmatpush.bf16.msra.mxu0 0
    %883 = vmatpush.bf16.msra.mxu0 %v868
    %884 = vmatpush.bf16.msra.mxu0 %v867
    %885 = vmatmul.bf16.gmra.mxu0 %v872
    %v886 = vpop.f32.mrf.mxu0
    %v887 = vadd.f32 %v850, %v886
    %v888 = vpop.f32.mrf.mxu0
    %v889 = vadd.f32 %v852, %v888
    %890 = vmatmul.bf16.gmra.mxu0 %v875
    %v891 = vpop.f32.mrf.mxu0
    %v892 = vadd.f32 %v855, %v891
    %v893 = vpop.f32.mrf.mxu0
    %v894 = vadd.f32 %v857, %v893
    %895 = vdwg.mxu0
    %v896 = vpack.c.bf16 %v431, %v429
    %v897 = vpack.c.bf16 %v436, %v434
    %v898 = vpack.c.bf16 %v460, %v458
    %v899 = vpack.c.bf16 %v465, %v463
    %902 = vrot.lane.b32.xlu0 %v896, 64
    %v903 = vpop.permute.xlu0 %902
    %904 = vrot.lane.b32.xlu0 %v897, 64
    %v905 = vpop.permute.xlu0 %904
    %v907 = vsel %vm485, %v896, 0
    %v910 = vsel %vm485, %v897, 0
    %v913 = vsel %vm485, %v903, 0
    %v916 = vsel %vm485, %v905, 0
    %918 = vmatpush.bf16.xpose.msra.mxu0 0
    %919 = vmatpush.bf16.xpose.msra.mxu0 0
    %920 = vmatpush.bf16.xpose.msra.mxu0 0
    %921 = vmatpush.bf16.xpose.msra.mxu0 0
    %922 = vmatpush.bf16.xpose.msra.mxu0 0
    %923 = vmatpush.bf16.xpose.msra.mxu0 0
    %924 = vmatpush.bf16.xpose.msra.mxu0 %v916
    %925 = vmatpush.bf16.xpose.msra.mxu0 %v913
    %926 = vmatmul.bf16.gmra.mxu0 %v907
    %v927 = vpop.f32.mrf.mxu0
    %v928 = vadd.f32 0.0, %v927
    %v929 = vpop.f32.mrf.mxu0
    %v930 = vadd.f32 0.0, %v929
    %931 = vmatmul.bf16.gmra.mxu0 %v910
    %v932 = vpop.f32.mrf.mxu0
    %v933 = vadd.f32 0.0, %v932
    %v934 = vpop.f32.mrf.mxu0
    %v935 = vadd.f32 0.0, %v934
    %936 = vdwg.mxu0
    %v937 = vmul.f32 %v928, 0.17677669
    %v938 = vmul.f32 %v930, 0.17677669
    %v939 = vmul.f32 %v933, 0.17677669
    %v940 = vmul.f32 %v935, 0.17677669
    %v941 = vsel %vm485, %v937, -inf
    %942 = vmax.xlane.f32.xlu0 %v941
    %v943 = vpop.xlane.xlu0 %942
    %v944 = vsel %vm485, %v938, -inf
    %945 = vmax.xlane.f32.xlu0 %v944
    %v946 = vpop.xlane.xlu0 %945
    %v947 = vsel %vm485, %v939, -inf
    %948 = vmax.xlane.f32.xlu0 %v947
    %v949 = vpop.xlane.xlu0 %948
    %v950 = vsel %vm485, %v940, -inf
    %951 = vmax.xlane.f32.xlu0 %v950
    %v952 = vpop.xlane.xlu0 %951
    %v953 = vsub.f32 %v937, %v943
    %v954 = vsub.f32 %v938, %v946
    %v955 = vsub.f32 %v939, %v949
    %v956 = vsub.f32 %v940, %v952
    %v957 = vmul.f32 %v953, 1.442695
    %v958 = vpow.pop %v957
    %v959 = vmul.f32 %v954, 1.442695
    %v960 = vpow.pop %v959
    %v961 = vmul.f32 %v955, 1.442695
    %v962 = vpow.pop %v961
    %v963 = vmul.f32 %v956, 1.442695
    %v964 = vpow.pop %v963
    %v965 = vsel %vm485, %v958, 0.0
    %966 = vadd.xlane.f32.xlu0 %v965
    %v967 = vpop.xlane.xlu0 %966
    %v968 = vsel %vm485, %v960, 0.0
    %969 = vadd.xlane.f32.xlu0 %v968
    %v970 = vpop.xlane.xlu0 %969
    %v971 = vsel %vm485, %v962, 0.0
    %972 = vadd.xlane.f32.xlu0 %v971
    %v973 = vpop.xlane.xlu0 %972
    %v974 = vsel %vm485, %v964, 0.0
    %975 = vadd.xlane.f32.xlu0 %v974
    %v976 = vpop.xlane.xlu0 %975
    %v977 = vrcp.pop %v967
    %v978 = vmul.f32 %v967, %v977
    %v979 = vsub.f32 1.0, %v978
    %v980 = vmul.f32 %v977, %v979
    %v981 = vadd.f32 %v977, %v980
    %vm982 = vweird.f32 %v967
    %vm983 = vweird.f32 %v977
    %vm984 = vmor %vm982, %vm983
    %v985 = vsel %vm984, %v977, %v981
    %v986 = vand.u32 2147483647, %v967
    %vm987 = vcmp.eq.f32.partialorder %v986, 8.507059e+37
    %v988 = vand.u32 %v967, 2147483648
    %v989 = vor.u32 1.1754944e-38, %v988
    %v990 = vsel %vm987, %v989, %v985
    %v991 = vmul.f32 %v958, %v990
    %v992 = vrcp.pop %v970
    %v993 = vmul.f32 %v970, %v992
    %v994 = vsub.f32 1.0, %v993
    %v995 = vmul.f32 %v992, %v994
    %v996 = vadd.f32 %v992, %v995
    %vm997 = vweird.f32 %v970
    %vm998 = vweird.f32 %v992
    %vm999 = vmor %vm997, %vm998
    %v1000 = vsel %vm999, %v992, %v996
    %v1001 = vand.u32 2147483647, %v970
    %vm1002 = vcmp.eq.f32.partialorder %v1001, 8.507059e+37
    %v1003 = vand.u32 %v970, 2147483648
    %v1004 = vor.u32 1.1754944e-38, %v1003
    %v1005 = vsel %vm1002, %v1004, %v1000
    %v1006 = vmul.f32 %v960, %v1005
    %v1007 = vrcp.pop %v973
    %v1008 = vmul.f32 %v973, %v1007
    %v1009 = vsub.f32 1.0, %v1008
    %v1010 = vmul.f32 %v1007, %v1009
    %v1011 = vadd.f32 %v1007, %v1010
    %vm1012 = vweird.f32 %v973
    %vm1013 = vweird.f32 %v1007
    %vm1014 = vmor %vm1012, %vm1013
    %v1015 = vsel %vm1014, %v1007, %v1011
    %v1016 = vand.u32 2147483647, %v973
    %vm1017 = vcmp.eq.f32.partialorder %v1016, 8.507059e+37
    %v1018 = vand.u32 %v973, 2147483648
    %v1019 = vor.u32 1.1754944e-38, %v1018
    %v1020 = vsel %vm1017, %v1019, %v1015
    %v1021 = vmul.f32 %v962, %v1020
    %v1022 = vrcp.pop %v976
    %v1023 = vmul.f32 %v976, %v1022
    %v1024 = vsub.f32 1.0, %v1023
    %v1025 = vmul.f32 %v1022, %v1024
    %v1026 = vadd.f32 %v1022, %v1025
    %vm1027 = vweird.f32 %v976
    %vm1028 = vweird.f32 %v1022
    %vm1029 = vmor %vm1027, %vm1028
    %v1030 = vsel %vm1029, %v1022, %v1026
    %v1031 = vand.u32 2147483647, %v976
    %vm1032 = vcmp.eq.f32.partialorder %v1031, 8.507059e+37
    %v1033 = vand.u32 %v976, 2147483648
    %v1034 = vor.u32 1.1754944e-38, %v1033
    %v1035 = vsel %vm1032, %v1034, %v1030
    %v1036 = vmul.f32 %v964, %v1035
    %v1037 = vpack.c.bf16 %v1006, %v991
    %v1038 = vpack.c.bf16 %v1036, %v1021
    %v1040 = vsel %vm485, %v1037, 0
    %v1043 = vsel %vm485, %v1038, 0
    %1045 = vmatpush.bf16.msra.mxu0 0
    %1046 = vmatpush.bf16.msra.mxu0 0
    %1047 = vmatpush.bf16.msra.mxu0 0
    %1048 = vmatpush.bf16.msra.mxu0 0
    %1049 = vmatpush.bf16.msra.mxu0 0
    %1050 = vmatpush.bf16.msra.mxu0 0
    %1051 = vmatpush.bf16.msra.mxu0 %v899
    %1052 = vmatpush.bf16.msra.mxu0 %v898
    %1053 = vmatmul.bf16.gmra.mxu0 %v1040
    %v1054 = vpop.f32.mrf.mxu0
    %v1055 = vadd.f32 0.0, %v1054
    %v1056 = vpop.f32.mrf.mxu0
    %v1057 = vadd.f32 0.0, %v1056
    %1058 = vmatmul.bf16.gmra.mxu0 %v1043
    %v1059 = vpop.f32.mrf.mxu0
    %v1060 = vadd.f32 0.0, %v1059
    %v1061 = vpop.f32.mrf.mxu0
    %v1062 = vadd.f32 0.0, %v1061
    %1063 = vdwg.mxu0
    %v1064 = vpack.c.bf16 %v1057, %v1055
    %v1065 = vpack.c.bf16 %v1062, %v1060
    %1066 = vrot.lane.b32.xlu0 %v896, 96
    %v1067 = vpop.permute.xlu0 %1066
    %1068 = vrot.lane.b32.xlu0 %v897, 96
    %v1069 = vpop.permute.xlu0 %1068
    %1070 = vrot.lane.b32.xlu0 %v896, 32
    %v1071 = vpop.permute.xlu0 %1070
    %1072 = vrot.lane.b32.xlu0 %v897, 32
    %v1073 = vpop.permute.xlu0 %1072
    %v1075 = vsel %vm485, %v1067, 0
    %v1078 = vsel %vm485, %v1069, 0
    %v1081 = vsel %vm485, %v1071, 0
    %v1084 = vsel %vm485, %v1073, 0
    %1086 = vmatpush.bf16.xpose.msra.mxu0 0
    %1087 = vmatpush.bf16.xpose.msra.mxu0 0
    %1088 = vmatpush.bf16.xpose.msra.mxu0 0
    %1089 = vmatpush.bf16.xpose.msra.mxu0 0
    %1090 = vmatpush.bf16.xpose.msra.mxu0 0
    %1091 = vmatpush.bf16.xpose.msra.mxu0 0
    %1092 = vmatpush.bf16.xpose.msra.mxu0 %v1084
    %1093 = vmatpush.bf16.xpose.msra.mxu0 %v1081
    %1094 = vmatmul.bf16.gmra.mxu0 %v1075
    %v1095 = vpop.f32.mrf.mxu0
    %v1096 = vadd.f32 0.0, %v1095
    %v1097 = vpop.f32.mrf.mxu0
    %v1098 = vadd.f32 0.0, %v1097
    %1099 = vmatmul.bf16.gmra.mxu0 %v1078
    %v1100 = vpop.f32.mrf.mxu0
    %v1101 = vadd.f32 0.0, %v1100
    %v1102 = vpop.f32.mrf.mxu0
    %v1103 = vadd.f32 0.0, %v1102
    %1104 = vdwg.mxu0
    %v1105 = vmul.f32 %v1096, 0.17677669
    %v1106 = vmul.f32 %v1098, 0.17677669
    %v1107 = vmul.f32 %v1101, 0.17677669
    %v1108 = vmul.f32 %v1103, 0.17677669
    %v1109 = vsel %vm485, %v1105, -inf
    %1110 = vmax.xlane.f32.xlu0 %v1109
    %v1111 = vpop.xlane.xlu0 %1110
    %v1112 = vsel %vm485, %v1106, -inf
    %1113 = vmax.xlane.f32.xlu0 %v1112
    %v1114 = vpop.xlane.xlu0 %1113
    %v1115 = vsel %vm485, %v1107, -inf
    %1116 = vmax.xlane.f32.xlu0 %v1115
    %v1117 = vpop.xlane.xlu0 %1116
    %v1118 = vsel %vm485, %v1108, -inf
    %1119 = vmax.xlane.f32.xlu0 %v1118
    %v1120 = vpop.xlane.xlu0 %1119
    %v1121 = vsub.f32 %v1105, %v1111
    %v1122 = vsub.f32 %v1106, %v1114
    %v1123 = vsub.f32 %v1107, %v1117
    %v1124 = vsub.f32 %v1108, %v1120
    %v1125 = vmul.f32 %v1121, 1.442695
    %v1126 = vpow.pop %v1125
    %v1127 = vmul.f32 %v1122, 1.442695
    %v1128 = vpow.pop %v1127
    %v1129 = vmul.f32 %v1123, 1.442695
    %v1130 = vpow.pop %v1129
    %v1131 = vmul.f32 %v1124, 1.442695
    %v1132 = vpow.pop %v1131
    %v1133 = vsel %vm485, %v1126, 0.0
    %1134 = vadd.xlane.f32.xlu0 %v1133
    %v1135 = vpop.xlane.xlu0 %1134
    %v1136 = vsel %vm485, %v1128, 0.0
    %1137 = vadd.xlane.f32.xlu0 %v1136
    %v1138 = vpop.xlane.xlu0 %1137
    %v1139 = vsel %vm485, %v1130, 0.0
    %1140 = vadd.xlane.f32.xlu0 %v1139
    %v1141 = vpop.xlane.xlu0 %1140
    %v1142 = vsel %vm485, %v1132, 0.0
    %1143 = vadd.xlane.f32.xlu0 %v1142
    %v1144 = vpop.xlane.xlu0 %1143
    %v1145 = vrcp.pop %v1135
    %v1146 = vmul.f32 %v1135, %v1145
    %v1147 = vsub.f32 1.0, %v1146
    %v1148 = vmul.f32 %v1145, %v1147
    %v1149 = vadd.f32 %v1145, %v1148
    %vm1150 = vweird.f32 %v1135
    %vm1151 = vweird.f32 %v1145
    %vm1152 = vmor %vm1150, %vm1151
    %v1153 = vsel %vm1152, %v1145, %v1149
    %v1154 = vand.u32 2147483647, %v1135
    %vm1155 = vcmp.eq.f32.partialorder %v1154, 8.507059e+37
    %v1156 = vand.u32 %v1135, 2147483648
    %v1157 = vor.u32 1.1754944e-38, %v1156
    %v1158 = vsel %vm1155, %v1157, %v1153
    %v1159 = vmul.f32 %v1126, %v1158
    %v1160 = vrcp.pop %v1138
    %v1161 = vmul.f32 %v1138, %v1160
    %v1162 = vsub.f32 1.0, %v1161
    %v1163 = vmul.f32 %v1160, %v1162
    %v1164 = vadd.f32 %v1160, %v1163
    %vm1165 = vweird.f32 %v1138
    %vm1166 = vweird.f32 %v1160
    %vm1167 = vmor %vm1165, %vm1166
    %v1168 = vsel %vm1167, %v1160, %v1164
    %v1169 = vand.u32 2147483647, %v1138
    %vm1170 = vcmp.eq.f32.partialorder %v1169, 8.507059e+37
    %v1171 = vand.u32 %v1138, 2147483648
    %v1172 = vor.u32 1.1754944e-38, %v1171
    %v1173 = vsel %vm1170, %v1172, %v1168
    %v1174 = vmul.f32 %v1128, %v1173
    %v1175 = vrcp.pop %v1141
    %v1176 = vmul.f32 %v1141, %v1175
    %v1177 = vsub.f32 1.0, %v1176
    %v1178 = vmul.f32 %v1175, %v1177
    %v1179 = vadd.f32 %v1175, %v1178
    %vm1180 = vweird.f32 %v1141
    %vm1181 = vweird.f32 %v1175
    %vm1182 = vmor %vm1180, %vm1181
    %v1183 = vsel %vm1182, %v1175, %v1179
    %v1184 = vand.u32 2147483647, %v1141
    %vm1185 = vcmp.eq.f32.partialorder %v1184, 8.507059e+37
    %v1186 = vand.u32 %v1141, 2147483648
    %v1187 = vor.u32 1.1754944e-38, %v1186
    %v1188 = vsel %vm1185, %v1187, %v1183
    %v1189 = vmul.f32 %v1130, %v1188
    %v1190 = vrcp.pop %v1144
    %v1191 = vmul.f32 %v1144, %v1190
    %v1192 = vsub.f32 1.0, %v1191
    %v1193 = vmul.f32 %v1190, %v1192
    %v1194 = vadd.f32 %v1190, %v1193
    %vm1195 = vweird.f32 %v1144
    %vm1196 = vweird.f32 %v1190
    %vm1197 = vmor %vm1195, %vm1196
    %v1198 = vsel %vm1197, %v1190, %v1194
    %v1199 = vand.u32 2147483647, %v1144
    %vm1200 = vcmp.eq.f32.partialorder %v1199, 8.507059e+37
    %v1201 = vand.u32 %v1144, 2147483648
    %v1202 = vor.u32 1.1754944e-38, %v1201
    %v1203 = vsel %vm1200, %v1202, %v1198
    %v1204 = vmul.f32 %v1132, %v1203
    %v1205 = vpack.c.bf16 %v1174, %v1159
    %v1206 = vpack.c.bf16 %v1204, %v1189
    %1209 = vrot.lane.b32.xlu0 %v898, 96
    %v1210 = vpop.permute.xlu0 %1209
    %1211 = vrot.lane.b32.xlu0 %v899, 96
    %v1212 = vpop.permute.xlu0 %1211
    %v1216 = vsel %vm485, %v1205, 0
    %v1219 = vsel %vm485, %v1206, 0
    %1221 = vmatpush.bf16.msra.mxu0 0
    %1222 = vmatpush.bf16.msra.mxu0 0
    %1223 = vmatpush.bf16.msra.mxu0 0
    %1224 = vmatpush.bf16.msra.mxu0 0
    %1225 = vmatpush.bf16.msra.mxu0 0
    %1226 = vmatpush.bf16.msra.mxu0 0
    %1227 = vmatpush.bf16.msra.mxu0 %v1212
    %1228 = vmatpush.bf16.msra.mxu0 %v1210
    %1229 = vmatmul.bf16.gmra.mxu0 %v1216
    %v1230 = vpop.f32.mrf.mxu0
    %v1231 = vadd.f32 0.0, %v1230
    %v1232 = vpop.f32.mrf.mxu0
    %v1233 = vadd.f32 0.0, %v1232
    %1234 = vmatmul.bf16.gmra.mxu0 %v1219
    %v1235 = vpop.f32.mrf.mxu0
    %v1236 = vadd.f32 0.0, %v1235
    %v1237 = vpop.f32.mrf.mxu0
    %v1238 = vadd.f32 0.0, %v1237
    %1239 = vdwg.mxu0
    %v1240 = vpack.c.bf16 %v1233, %v1231
    %v1241 = vpack.c.bf16 %v1238, %v1236
    %v1243 = vsel %vm485, %v1240, 0
    %v1246 = vsel %vm485, %v1241, 0
    %1248 = vmatpush.bf16.msra.mxu0 0
    %1249 = vmatpush.bf16.msra.mxu0 0
    %1250 = vmatpush.bf16.msra.mxu0 0
    %1251 = vmatpush.bf16.msra.mxu0 0
    %1252 = vmatpush.bf16.msra.mxu0 0
    %1253 = vmatpush.bf16.msra.mxu0 0
    %1254 = vmatpush.bf16.msra.mxu0 %v831
    %1255 = vmatpush.bf16.msra.mxu0 %v830
    %1256 = vmatmul.bf16.gmra.mxu0 %v1243
    %v1257 = vpop.f32.mrf.mxu0
    %v1258 = vadd.f32 0.0, %v1257
    %v1259 = vpop.f32.mrf.mxu0
    %v1260 = vadd.f32 0.0, %v1259
    %1261 = vmatmul.bf16.gmra.mxu0 %v1246
    %v1262 = vpop.f32.mrf.mxu0
    %v1263 = vadd.f32 0.0, %v1262
    %v1264 = vpop.f32.mrf.mxu0
    %v1265 = vadd.f32 0.0, %v1264
    %1266 = vdwg.mxu0
    %v1268 = vsel %vm485, %v1064, 0
    %v1271 = vsel %vm485, %v1065, 0
    %1273 = vmatpush.bf16.msra.mxu0 0
    %1274 = vmatpush.bf16.msra.mxu0 0
    %1275 = vmatpush.bf16.msra.mxu0 0
    %1276 = vmatpush.bf16.msra.mxu0 0
    %1277 = vmatpush.bf16.msra.mxu0 0
    %1278 = vmatpush.bf16.msra.mxu0 0
    %1279 = vmatpush.bf16.msra.mxu0 %v868
    %1280 = vmatpush.bf16.msra.mxu0 %v867
    %1281 = vmatmul.bf16.gmra.mxu0 %v1268
    %v1282 = vpop.f32.mrf.mxu0
    %v1283 = vadd.f32 %v1258, %v1282
    %v1284 = vpop.f32.mrf.mxu0
    %v1285 = vadd.f32 %v1260, %v1284
    %1286 = vmatmul.bf16.gmra.mxu0 %v1271
    %v1287 = vpop.f32.mrf.mxu0
    %v1288 = vadd.f32 %v1263, %v1287
    %v1289 = vpop.f32.mrf.mxu0
    %v1290 = vadd.f32 %v1265, %v1289
    %1291 = vdwg.mxu0
    %v1292 = vadd.f32 %v140, %v887
    %v1293 = vadd.f32 %v142, %v889
    %v1294 = vadd.f32 %v145, %v892
    %v1295 = vadd.f32 %v147, %v894
    %v1296 = vadd.f32 %v150, %v1283
    %v1297 = vadd.f32 %v152, %v1285
    %v1298 = vadd.f32 %v155, %v1288
    %v1299 = vadd.f32 %v157, %v1290
    %v1300 = vperm.slane %v31, 2
    %v1301 = vadd.f32 %v1292, %v1300
    %v1302 = vadd.f32 %v1293, %v1300
    %v1303 = vadd.f32 %v1294, %v1300
    %v1304 = vadd.f32 %v1295, %v1300
    %v1305 = vadd.f32 %v1296, %v1300
    %v1306 = vadd.f32 %v1297, %v1300
    %v1307 = vadd.f32 %v1298, %v1300
    %v1308 = vadd.f32 %v1299, %v1300
    %v1309 = vsel %vm159, %v1301, 0.0
    %1310 = vadd.xlane.f32.xlu0 %v1309
    %v1311 = vpop.xlane.xlu0 %1310
    %v1312 = vsel %vm159, %v1302, 0.0
    %1313 = vadd.xlane.f32.xlu0 %v1312
    %v1314 = vpop.xlane.xlu0 %1313
    %v1315 = vsel %vm159, %v1303, 0.0
    %1316 = vadd.xlane.f32.xlu0 %v1315
    %v1317 = vpop.xlane.xlu0 %1316
    %v1318 = vsel %vm159, %v1304, 0.0
    %1319 = vadd.xlane.f32.xlu0 %v1318
    %v1320 = vpop.xlane.xlu0 %1319
    %v1321 = vsel %vm159, %v1305, 0.0
    %1322 = vadd.xlane.f32.xlu0 %v1321
    %v1323 = vpop.xlane.xlu0 %1322
    %v1324 = vsel %vm159, %v1306, 0.0
    %1325 = vadd.xlane.f32.xlu0 %v1324
    %v1326 = vpop.xlane.xlu0 %1325
    %v1327 = vsel %vm159, %v1307, 0.0
    %1328 = vadd.xlane.f32.xlu0 %v1327
    %v1329 = vpop.xlane.xlu0 %1328
    %v1330 = vsel %vm159, %v1308, 0.0
    %1331 = vadd.xlane.f32.xlu0 %v1330
    %v1332 = vpop.xlane.xlu0 %1331
    %v1333 = vmul.f32 %v1311, %v190
    %v1334 = vmul.f32 %v1314, %v190
    %v1335 = vmul.f32 %v1317, %v190
    %v1336 = vmul.f32 %v1320, %v190
    %v1337 = vmul.f32 %v1323, %v190
    %v1338 = vmul.f32 %v1326, %v190
    %v1339 = vmul.f32 %v1329, %v190
    %v1340 = vmul.f32 %v1332, %v190
    %v1341 = vsub.f32 %v1301, %v1333
    %v1342 = vsub.f32 %v1302, %v1334
    %v1343 = vsub.f32 %v1303, %v1335
    %v1344 = vsub.f32 %v1304, %v1336
    %v1345 = vsub.f32 %v1305, %v1337
    %v1346 = vsub.f32 %v1306, %v1338
    %v1347 = vsub.f32 %v1307, %v1339
    %v1348 = vsub.f32 %v1308, %v1340
    %v1349 = vmul.f32 %v1341, %v1341
    %v1350 = vmul.f32 %v1342, %v1342
    %v1351 = vmul.f32 %v1343, %v1343
    %v1352 = vmul.f32 %v1344, %v1344
    %v1353 = vmul.f32 %v1345, %v1345
    %v1354 = vmul.f32 %v1346, %v1346
    %v1355 = vmul.f32 %v1347, %v1347
    %v1356 = vmul.f32 %v1348, %v1348
    %v1357 = vsel %vm159, %v1349, 0.0
    %1358 = vadd.xlane.f32.xlu0 %v1357
    %v1359 = vpop.xlane.xlu0 %1358
    %v1360 = vsel %vm159, %v1350, 0.0
    %1361 = vadd.xlane.f32.xlu0 %v1360
    %v1362 = vpop.xlane.xlu0 %1361
    %v1363 = vsel %vm159, %v1351, 0.0
    %1364 = vadd.xlane.f32.xlu0 %v1363
    %v1365 = vpop.xlane.xlu0 %1364
    %v1366 = vsel %vm159, %v1352, 0.0
    %1367 = vadd.xlane.f32.xlu0 %v1366
    %v1368 = vpop.xlane.xlu0 %1367
    %v1369 = vsel %vm159, %v1353, 0.0
    %1370 = vadd.xlane.f32.xlu0 %v1369
    %v1371 = vpop.xlane.xlu0 %1370
    %v1372 = vsel %vm159, %v1354, 0.0
    %1373 = vadd.xlane.f32.xlu0 %v1372
    %v1374 = vpop.xlane.xlu0 %1373
    %v1375 = vsel %vm159, %v1355, 0.0
    %1376 = vadd.xlane.f32.xlu0 %v1375
    %v1377 = vpop.xlane.xlu0 %1376
    %v1378 = vsel %vm159, %v1356, 0.0
    %1379 = vadd.xlane.f32.xlu0 %v1378
    %v1380 = vpop.xlane.xlu0 %1379
    %v1381 = vmul.f32 %v1359, %v190
    %v1382 = vmul.f32 %v1362, %v190
    %v1383 = vmul.f32 %v1365, %v190
    %v1384 = vmul.f32 %v1368, %v190
    %v1385 = vmul.f32 %v1371, %v190
    %v1386 = vmul.f32 %v1374, %v190
    %v1387 = vmul.f32 %v1377, %v190
    %v1388 = vmul.f32 %v1380, %v190
    %v1389 = vadd.f32 %v1381, 1e-05
    %v1390 = vadd.f32 %v1382, 1e-05
    %v1391 = vadd.f32 %v1383, 1e-05
    %v1392 = vadd.f32 %v1384, 1e-05
    %v1393 = vadd.f32 %v1385, 1e-05
    %v1394 = vadd.f32 %v1386, 1e-05
    %v1395 = vadd.f32 %v1387, 1e-05
    %v1396 = vadd.f32 %v1388, 1e-05
    %v1397 = vrsqrt.pop %v1389
    %v1398 = vmul.f32 %v1397, %v1389
    %v1399 = vmul.f32 %v1398, %v1397
    %v1400 = vmul.f32 0.5, %v1399
    %v1401 = vsub.f32 1.5, %v1400
    %v1402 = vmul.f32 %v1397, %v1401
    %vm1403 = vweird.f32 %v1389
    %vm1404 = vweird.f32 %v1397
    %vm1405 = vmor %vm1403, %vm1404
    %v1406 = vsel %vm1405, %v1397, %v1402
    %v1407 = vrsqrt.pop %v1390
    %v1408 = vmul.f32 %v1407, %v1390
    %v1409 = vmul.f32 %v1408, %v1407
    %v1410 = vmul.f32 0.5, %v1409
    %v1411 = vsub.f32 1.5, %v1410
    %v1412 = vmul.f32 %v1407, %v1411
    %vm1413 = vweird.f32 %v1390
    %vm1414 = vweird.f32 %v1407
    %vm1415 = vmor %vm1413, %vm1414
    %v1416 = vsel %vm1415, %v1407, %v1412
    %v1417 = vrsqrt.pop %v1391
    %v1418 = vmul.f32 %v1417, %v1391
    %v1419 = vmul.f32 %v1418, %v1417
    %v1420 = vmul.f32 0.5, %v1419
    %v1421 = vsub.f32 1.5, %v1420
    %v1422 = vmul.f32 %v1417, %v1421
    %vm1423 = vweird.f32 %v1391
    %vm1424 = vweird.f32 %v1417
    %vm1425 = vmor %vm1423, %vm1424
    %v1426 = vsel %vm1425, %v1417, %v1422
    %v1427 = vrsqrt.pop %v1392
    %v1428 = vmul.f32 %v1427, %v1392
    %v1429 = vmul.f32 %v1428, %v1427
    %v1430 = vmul.f32 0.5, %v1429
    %v1431 = vsub.f32 1.5, %v1430
    %v1432 = vmul.f32 %v1427, %v1431
    %vm1433 = vweird.f32 %v1392
    %vm1434 = vweird.f32 %v1427
    %vm1435 = vmor %vm1433, %vm1434
    %v1436 = vsel %vm1435, %v1427, %v1432
    %v1437 = vrsqrt.pop %v1393
    %v1438 = vmul.f32 %v1437, %v1393
    %v1439 = vmul.f32 %v1438, %v1437
    %v1440 = vmul.f32 0.5, %v1439
    %v1441 = vsub.f32 1.5, %v1440
    %v1442 = vmul.f32 %v1437, %v1441
    %vm1443 = vweird.f32 %v1393
    %vm1444 = vweird.f32 %v1437
    %vm1445 = vmor %vm1443, %vm1444
    %v1446 = vsel %vm1445, %v1437, %v1442
    %v1447 = vrsqrt.pop %v1394
    %v1448 = vmul.f32 %v1447, %v1394
    %v1449 = vmul.f32 %v1448, %v1447
    %v1450 = vmul.f32 0.5, %v1449
    %v1451 = vsub.f32 1.5, %v1450
    %v1452 = vmul.f32 %v1447, %v1451
    %vm1453 = vweird.f32 %v1394
    %vm1454 = vweird.f32 %v1447
    %vm1455 = vmor %vm1453, %vm1454
    %v1456 = vsel %vm1455, %v1447, %v1452
    %v1457 = vrsqrt.pop %v1395
    %v1458 = vmul.f32 %v1457, %v1395
    %v1459 = vmul.f32 %v1458, %v1457
    %v1460 = vmul.f32 0.5, %v1459
    %v1461 = vsub.f32 1.5, %v1460
    %v1462 = vmul.f32 %v1457, %v1461
    %vm1463 = vweird.f32 %v1395
    %vm1464 = vweird.f32 %v1457
    %vm1465 = vmor %vm1463, %vm1464
    %v1466 = vsel %vm1465, %v1457, %v1462
    %v1467 = vrsqrt.pop %v1396
    %v1468 = vmul.f32 %v1467, %v1396
    %v1469 = vmul.f32 %v1468, %v1467
    %v1470 = vmul.f32 0.5, %v1469
    %v1471 = vsub.f32 1.5, %v1470
    %v1472 = vmul.f32 %v1467, %v1471
    %vm1473 = vweird.f32 %v1396
    %vm1474 = vweird.f32 %v1467
    %vm1475 = vmor %vm1473, %vm1474
    %v1476 = vsel %vm1475, %v1467, %v1472
    %v1477 = vmul.f32 %v1341, %v1406
    %v1478 = vmul.f32 %v1342, %v1416
    %v1479 = vmul.f32 %v1343, %v1426
    %v1480 = vmul.f32 %v1344, %v1436
    %v1481 = vmul.f32 %v1345, %v1446
    %v1482 = vmul.f32 %v1346, %v1456
    %v1483 = vmul.f32 %v1347, %v1466
    %v1484 = vmul.f32 %v1348, %v1476
    %v1485 = vpack.c.bf16 %v1478, %v1477
    %v1486 = vpack.c.bf16 %v1480, %v1479
    %v1487 = vpack.c.bf16 %v1482, %v1481
    %v1488 = vpack.c.bf16 %v1484, %v1483
    %v1489 = vld [vmem:[%s4] sm:$0xff]
    %v1490 = vld [vmem:[%s4 + $0x8] sm:$0xff]
    %v1491 = vld [vmem:[%s4 + $0x10] sm:$0xff]
    %v1492 = vld [vmem:[%s4 + $0x18] sm:$0xff]
    %v1493 = vld [vmem:[%s4 + $0x20] sm:$0xff]
    %v1494 = vld [vmem:[%s4 + $0x28] sm:$0xff]
    %v1495 = vld [vmem:[%s4 + $0x30] sm:$0xff]
    %v1496 = vld [vmem:[%s4 + $0x38] sm:$0xff]
    %v1497 = vperm.slane %v31, 3
    %v1498 = vperm.slane %v32, 3
    %v1507 = vunpack.c.l.b16 %v1489
    %v1508 = vunpack.c.h.b16 %v1489
    %v1509 = vunpack.c.l.b16 %v1490
    %v1510 = vunpack.c.h.b16 %v1490
    %v1511 = vunpack.c.l.b16 %v1491
    %v1512 = vunpack.c.h.b16 %v1491
    %v1513 = vunpack.c.l.b16 %v1492
    %v1514 = vunpack.c.h.b16 %v1492
    %v1515 = vunpack.c.l.b16 %v1493
    %v1516 = vunpack.c.h.b16 %v1493
    %v1517 = vunpack.c.l.b16 %v1494
    %v1518 = vunpack.c.h.b16 %v1494
    %v1519 = vunpack.c.l.b16 %v1495
    %v1520 = vunpack.c.h.b16 %v1495
    %v1521 = vunpack.c.l.b16 %v1496
    %v1522 = vunpack.c.h.b16 %v1496
    %v1523 = vpack.c.b16 %v1509, %v1507
    %v1524 = vpack.c.b16 %v1510, %v1508
    %v1525 = vpack.c.b16 %v1513, %v1511
    %v1526 = vpack.c.b16 %v1514, %v1512
    %v1527 = vpack.c.b16 %v1517, %v1515
    %v1528 = vpack.c.b16 %v1518, %v1516
    %v1529 = vpack.c.b16 %v1521, %v1519
    %v1530 = vpack.c.b16 %v1522, %v1520
    %v1540 = vsel %vm159, %v1485, 0
    %v1543 = vsel %vm159, %v1486, 0
    %v1546 = vsel %vm159, %v1487, 0
    %v1549 = vsel %vm159, %v1488, 0
    %1551 = vmatpush.bf16.msra.mxu0 0
    %1552 = vmatpush.bf16.msra.mxu0 0
    %1553 = vmatpush.bf16.msra.mxu0 0
    %1554 = vmatpush.bf16.msra.mxu0 0
    %1555 = vmatpush.bf16.msra.mxu0 %v1529
    %1556 = vmatpush.bf16.msra.mxu0 %v1527
    %1557 = vmatpush.bf16.msra.mxu0 %v1525
    %1558 = vmatpush.bf16.msra.mxu0 %v1523
    %1559 = vmatmul.bf16.gmra.mxu0 %v1540
    %v1560 = vpop.f32.mrf.mxu0
    %v1561 = vadd.f32 %v1497, %v1560
    %v1562 = vpop.f32.mrf.mxu0
    %v1563 = vadd.f32 %v1497, %v1562
    %1564 = vmatmul.bf16.gmra.mxu0 %v1543
    %v1565 = vpop.f32.mrf.mxu0
    %v1566 = vadd.f32 %v1497, %v1565
    %v1567 = vpop.f32.mrf.mxu0
    %v1568 = vadd.f32 %v1497, %v1567
    %1569 = vmatmul.bf16.gmra.mxu0 %v1546
    %v1570 = vpop.f32.mrf.mxu0
    %v1571 = vadd.f32 %v1497, %v1570
    %v1572 = vpop.f32.mrf.mxu0
    %v1573 = vadd.f32 %v1497, %v1572
    %1574 = vmatmul.bf16.gmra.mxu0 %v1549
    %v1575 = vpop.f32.mrf.mxu0
    %v1576 = vadd.f32 %v1497, %v1575
    %v1577 = vpop.f32.mrf.mxu0
    %v1578 = vadd.f32 %v1497, %v1577
    %1579 = vdwg.mxu0
    %1580 = vmatpush.bf16.msra.mxu0 0
    %1581 = vmatpush.bf16.msra.mxu0 0
    %1582 = vmatpush.bf16.msra.mxu0 0
    %1583 = vmatpush.bf16.msra.mxu0 0
    %1584 = vmatpush.bf16.msra.mxu0 %v1530
    %1585 = vmatpush.bf16.msra.mxu0 %v1528
    %1586 = vmatpush.bf16.msra.mxu0 %v1526
    %1587 = vmatpush.bf16.msra.mxu0 %v1524
    %1588 = vmatmul.bf16.gmra.mxu0 %v1540
    %v1589 = vpop.f32.mrf.mxu0
    %v1590 = vadd.f32 %v1498, %v1589
    %v1591 = vpop.f32.mrf.mxu0
    %v1592 = vadd.f32 %v1498, %v1591
    %1593 = vmatmul.bf16.gmra.mxu0 %v1543
    %v1594 = vpop.f32.mrf.mxu0
    %v1595 = vadd.f32 %v1498, %v1594
    %v1596 = vpop.f32.mrf.mxu0
    %v1597 = vadd.f32 %v1498, %v1596
    %1598 = vmatmul.bf16.gmra.mxu0 %v1546
    %v1599 = vpop.f32.mrf.mxu0
    %v1600 = vadd.f32 %v1498, %v1599
    %v1601 = vpop.f32.mrf.mxu0
    %v1602 = vadd.f32 %v1498, %v1601
    %1603 = vmatmul.bf16.gmra.mxu0 %v1549
    %v1604 = vpop.f32.mrf.mxu0
    %v1605 = vadd.f32 %v1498, %v1604
    %v1606 = vpop.f32.mrf.mxu0
    %v1607 = vadd.f32 %v1498, %v1606
    %1608 = vdwg.mxu0
    %v1609 = vmul.f32 %v1561, %v1561
    %v1610 = vmul.f32 %v1590, %v1590
    %v1611 = vmul.f32 %v1563, %v1563
    %v1612 = vmul.f32 %v1592, %v1592
    %v1613 = vmul.f32 %v1566, %v1566
    %v1614 = vmul.f32 %v1595, %v1595
    %v1615 = vmul.f32 %v1568, %v1568
    %v1616 = vmul.f32 %v1597, %v1597
    %v1617 = vmul.f32 %v1571, %v1571
    %v1618 = vmul.f32 %v1600, %v1600
    %v1619 = vmul.f32 %v1573, %v1573
    %v1620 = vmul.f32 %v1602, %v1602
    %v1621 = vmul.f32 %v1576, %v1576
    %v1622 = vmul.f32 %v1605, %v1605
    %v1623 = vmul.f32 %v1578, %v1578
    %v1624 = vmul.f32 %v1607, %v1607
    %v1625 = vmul.f32 %v1561, %v1609
    %v1626 = vmul.f32 %v1590, %v1610
    %v1627 = vmul.f32 %v1563, %v1611
    %v1628 = vmul.f32 %v1592, %v1612
    %v1629 = vmul.f32 %v1566, %v1613
    %v1630 = vmul.f32 %v1595, %v1614
    %v1631 = vmul.f32 %v1568, %v1615
    %v1632 = vmul.f32 %v1597, %v1616
    %v1633 = vmul.f32 %v1571, %v1617
    %v1634 = vmul.f32 %v1600, %v1618
    %v1635 = vmul.f32 %v1573, %v1619
    %v1636 = vmul.f32 %v1602, %v1620
    %v1637 = vmul.f32 %v1576, %v1621
    %v1638 = vmul.f32 %v1605, %v1622
    %v1639 = vmul.f32 %v1578, %v1623
    %v1640 = vmul.f32 %v1607, %v1624
    %v1641 = vmul.f32 %v1625, 0.044715
    %v1642 = vmul.f32 %v1626, 0.044715
    %v1643 = vmul.f32 %v1627, 0.044715
    %v1644 = vmul.f32 %v1628, 0.044715
    %v1645 = vmul.f32 %v1629, 0.044715
    %v1646 = vmul.f32 %v1630, 0.044715
    %v1647 = vmul.f32 %v1631, 0.044715
    %v1648 = vmul.f32 %v1632, 0.044715
    %v1649 = vmul.f32 %v1633, 0.044715
    %v1650 = vmul.f32 %v1634, 0.044715
    %v1651 = vmul.f32 %v1635, 0.044715
    %v1652 = vmul.f32 %v1636, 0.044715
    %v1653 = vmul.f32 %v1637, 0.044715
    %v1654 = vmul.f32 %v1638, 0.044715
    %v1655 = vmul.f32 %v1639, 0.044715
    %v1656 = vmul.f32 %v1640, 0.044715
    %v1657 = vadd.f32 %v1561, %v1641
    %v1658 = vadd.f32 %v1590, %v1642
    %v1659 = vadd.f32 %v1563, %v1643
    %v1660 = vadd.f32 %v1592, %v1644
    %v1661 = vadd.f32 %v1566, %v1645
    %v1662 = vadd.f32 %v1595, %v1646
    %v1663 = vadd.f32 %v1568, %v1647
    %v1664 = vadd.f32 %v1597, %v1648
    %v1665 = vadd.f32 %v1571, %v1649
    %v1666 = vadd.f32 %v1600, %v1650
    %v1667 = vadd.f32 %v1573, %v1651
    %v1668 = vadd.f32 %v1602, %v1652
    %v1669 = vadd.f32 %v1576, %v1653
    %v1670 = vadd.f32 %v1605, %v1654
    %v1671 = vadd.f32 %v1578, %v1655
    %v1672 = vadd.f32 %v1607, %v1656
    %v1673 = vmul.f32 %v1657, 0.7978846
    %v1674 = vmul.f32 %v1658, 0.7978846
    %v1675 = vmul.f32 %v1659, 0.7978846
    %v1676 = vmul.f32 %v1660, 0.7978846
    %v1677 = vmul.f32 %v1661, 0.7978846
    %v1678 = vmul.f32 %v1662, 0.7978846
    %v1679 = vmul.f32 %v1663, 0.7978846
    %v1680 = vmul.f32 %v1664, 0.7978846
    %v1681 = vmul.f32 %v1665, 0.7978846
    %v1682 = vmul.f32 %v1666, 0.7978846
    %v1683 = vmul.f32 %v1667, 0.7978846
    %v1684 = vmul.f32 %v1668, 0.7978846
    %v1685 = vmul.f32 %v1669, 0.7978846
    %v1686 = vmul.f32 %v1670, 0.7978846
    %v1687 = vmul.f32 %v1671, 0.7978846
    %v1688 = vmul.f32 %v1672, 0.7978846
    %v1689 = vtanh.pop %v1673
    %v1690 = vtanh.pop %v1674
    %v1691 = vtanh.pop %v1675
    %v1692 = vtanh.pop %v1676
    %v1693 = vtanh.pop %v1677
    %v1694 = vtanh.pop %v1678
    %v1695 = vtanh.pop %v1679
    %v1696 = vtanh.pop %v1680
    %v1697 = vtanh.pop %v1681
    %v1698 = vtanh.pop %v1682
    %v1699 = vtanh.pop %v1683
    %v1700 = vtanh.pop %v1684
    %v1701 = vtanh.pop %v1685
    %v1702 = vtanh.pop %v1686
    %v1703 = vtanh.pop %v1687
    %v1704 = vtanh.pop %v1688
    %v1705 = vadd.f32 %v1689, 1.0
    %v1706 = vadd.f32 %v1690, 1.0
    %v1707 = vadd.f32 %v1691, 1.0
    %v1708 = vadd.f32 %v1692, 1.0
    %v1709 = vadd.f32 %v1693, 1.0
    %v1710 = vadd.f32 %v1694, 1.0
    %v1711 = vadd.f32 %v1695, 1.0
    %v1712 = vadd.f32 %v1696, 1.0
    %v1713 = vadd.f32 %v1697, 1.0
    %v1714 = vadd.f32 %v1698, 1.0
    %v1715 = vadd.f32 %v1699, 1.0
    %v1716 = vadd.f32 %v1700, 1.0
    %v1717 = vadd.f32 %v1701, 1.0
    %v1718 = vadd.f32 %v1702, 1.0
    %v1719 = vadd.f32 %v1703, 1.0
    %v1720 = vadd.f32 %v1704, 1.0
    %v1721 = vmul.f32 %v1705, 0.5
    %v1722 = vmul.f32 %v1706, 0.5
    %v1723 = vmul.f32 %v1707, 0.5
    %v1724 = vmul.f32 %v1708, 0.5
    %v1725 = vmul.f32 %v1709, 0.5
    %v1726 = vmul.f32 %v1710, 0.5
    %v1727 = vmul.f32 %v1711, 0.5
    %v1728 = vmul.f32 %v1712, 0.5
    %v1729 = vmul.f32 %v1713, 0.5
    %v1730 = vmul.f32 %v1714, 0.5
    %v1731 = vmul.f32 %v1715, 0.5
    %v1732 = vmul.f32 %v1716, 0.5
    %v1733 = vmul.f32 %v1717, 0.5
    %v1734 = vmul.f32 %v1718, 0.5
    %v1735 = vmul.f32 %v1719, 0.5
    %v1736 = vmul.f32 %v1720, 0.5
    %v1737 = vmul.f32 %v1561, %v1721
    %v1738 = vmul.f32 %v1590, %v1722
    %v1739 = vmul.f32 %v1563, %v1723
    %v1740 = vmul.f32 %v1592, %v1724
    %v1741 = vmul.f32 %v1566, %v1725
    %v1742 = vmul.f32 %v1595, %v1726
    %v1743 = vmul.f32 %v1568, %v1727
    %v1744 = vmul.f32 %v1597, %v1728
    %v1745 = vmul.f32 %v1571, %v1729
    %v1746 = vmul.f32 %v1600, %v1730
    %v1747 = vmul.f32 %v1573, %v1731
    %v1748 = vmul.f32 %v1602, %v1732
    %v1749 = vmul.f32 %v1576, %v1733
    %v1750 = vmul.f32 %v1605, %v1734
    %v1751 = vmul.f32 %v1578, %v1735
    %v1752 = vmul.f32 %v1607, %v1736
    %v1753 = vpack.c.bf16 %v1739, %v1737
    %v1754 = vpack.c.bf16 %v1740, %v1738
    %v1755 = vpack.c.bf16 %v1743, %v1741
    %v1756 = vpack.c.bf16 %v1744, %v1742
    %v1757 = vpack.c.bf16 %v1747, %v1745
    %v1758 = vpack.c.bf16 %v1748, %v1746
    %v1759 = vpack.c.bf16 %v1751, %v1749
    %v1760 = vpack.c.bf16 %v1752, %v1750
    %v1761 = vld [vmem:[%s5] sm:$0xf]
    %v1762 = vld [vmem:[%s5 + $0x4] sm:$0xf]
    %v1763 = vld [vmem:[%s5 + $0x8] sm:$0xf]
    %v1764 = vld [vmem:[%s5 + $0xc] sm:$0xf]
    %v1765 = vld [vmem:[%s5 + $0x10] sm:$0xf]
    %v1766 = vld [vmem:[%s5 + $0x14] sm:$0xf]
    %v1767 = vld [vmem:[%s5 + $0x18] sm:$0xf]
    %v1768 = vld [vmem:[%s5 + $0x1c] sm:$0xf]
    %v1769 = vld [vmem:[%s5 + $0x20] sm:$0xf]
    %v1770 = vld [vmem:[%s5 + $0x24] sm:$0xf]
    %v1771 = vld [vmem:[%s5 + $0x28] sm:$0xf]
    %v1772 = vld [vmem:[%s5 + $0x2c] sm:$0xf]
    %v1773 = vld [vmem:[%s5 + $0x30] sm:$0xf]
    %v1774 = vld [vmem:[%s5 + $0x34] sm:$0xf]
    %v1775 = vld [vmem:[%s5 + $0x38] sm:$0xf]
    %v1776 = vld [vmem:[%s5 + $0x3c] sm:$0xf]
    %v1777 = vld [vmem:[%s5 + $0x40] sm:$0xf]
    %v1778 = vld [vmem:[%s5 + $0x44] sm:$0xf]
    %v1779 = vld [vmem:[%s5 + $0x48] sm:$0xf]
    %v1780 = vld [vmem:[%s5 + $0x4c] sm:$0xf]
    %v1781 = vld [vmem:[%s5 + $0x50] sm:$0xf]
    %v1782 = vld [vmem:[%s5 + $0x54] sm:$0xf]
    %v1783 = vld [vmem:[%s5 + $0x58] sm:$0xf]
    %v1784 = vld [vmem:[%s5 + $0x5c] sm:$0xf]
    %v1785 = vld [vmem:[%s5 + $0x60] sm:$0xf]
    %v1786 = vld [vmem:[%s5 + $0x64] sm:$0xf]
    %v1787 = vld [vmem:[%s5 + $0x68] sm:$0xf]
    %v1788 = vld [vmem:[%s5 + $0x6c] sm:$0xf]
    %v1789 = vld [vmem:[%s5 + $0x70] sm:$0xf]
    %v1790 = vld [vmem:[%s5 + $0x74] sm:$0xf]
    %v1791 = vld [vmem:[%s5 + $0x78] sm:$0xf]
    %v1792 = vld [vmem:[%s5 + $0x7c] sm:$0xf]
    %v1825 = vunpack.c.l.b16 %v1761
    %v1826 = vunpack.c.l.b16 %v1762
    %v1827 = vunpack.c.l.b16 %v1763
    %v1828 = vunpack.c.l.b16 %v1764
    %v1829 = vunpack.c.l.b16 %v1765
    %v1830 = vunpack.c.l.b16 %v1766
    %v1831 = vunpack.c.l.b16 %v1767
    %v1832 = vunpack.c.l.b16 %v1768
    %v1833 = vunpack.c.l.b16 %v1769
    %v1834 = vunpack.c.l.b16 %v1770
    %v1835 = vunpack.c.l.b16 %v1771
    %v1836 = vunpack.c.l.b16 %v1772
    %v1837 = vunpack.c.l.b16 %v1773
    %v1838 = vunpack.c.l.b16 %v1774
    %v1839 = vunpack.c.l.b16 %v1775
    %v1840 = vunpack.c.l.b16 %v1776
    %v1841 = vunpack.c.l.b16 %v1777
    %v1842 = vunpack.c.l.b16 %v1778
    %v1843 = vunpack.c.l.b16 %v1779
    %v1844 = vunpack.c.l.b16 %v1780
    %v1845 = vunpack.c.l.b16 %v1781
    %v1846 = vunpack.c.l.b16 %v1782
    %v1847 = vunpack.c.l.b16 %v1783
    %v1848 = vunpack.c.l.b16 %v1784
    %v1849 = vunpack.c.l.b16 %v1785
    %v1850 = vunpack.c.l.b16 %v1786
    %v1851 = vunpack.c.l.b16 %v1787
    %v1852 = vunpack.c.l.b16 %v1788
    %v1853 = vunpack.c.l.b16 %v1789
    %v1854 = vunpack.c.l.b16 %v1790
    %v1855 = vunpack.c.l.b16 %v1791
    %v1856 = vunpack.c.l.b16 %v1792
    %v1857 = vpack.c.b16 %v1826, %v1825
    %v1858 = vpack.c.b16 %v1828, %v1827
    %v1859 = vpack.c.b16 %v1830, %v1829
    %v1860 = vpack.c.b16 %v1832, %v1831
    %v1861 = vpack.c.b16 %v1834, %v1833
    %v1862 = vpack.c.b16 %v1836, %v1835
    %v1863 = vpack.c.b16 %v1838, %v1837
    %v1864 = vpack.c.b16 %v1840, %v1839
    %v1865 = vpack.c.b16 %v1842, %v1841
    %v1866 = vpack.c.b16 %v1844, %v1843
    %v1867 = vpack.c.b16 %v1846, %v1845
    %v1868 = vpack.c.b16 %v1848, %v1847
    %v1869 = vpack.c.b16 %v1850, %v1849
    %v1870 = vpack.c.b16 %v1852, %v1851
    %v1871 = vpack.c.b16 %v1854, %v1853
    %v1872 = vpack.c.b16 %v1856, %v1855
    %1889 = vmatpush.bf16.msra.mxu0 %v1864
    %1890 = vmatpush.bf16.msra.mxu0 %v1863
    %1891 = vmatpush.bf16.msra.mxu0 %v1862
    %1892 = vmatpush.bf16.msra.mxu0 %v1861
    %1893 = vmatpush.bf16.msra.mxu0 %v1860
    %1894 = vmatpush.bf16.msra.mxu0 %v1859
    %1895 = vmatpush.bf16.msra.mxu0 %v1858
    %1896 = vmatpush.bf16.msra.mxu0 %v1857
    %1897 = vmatmul.bf16.gmra.mxu0 %v1753
    %v1898 = vpop.f32.mrf.mxu0
    %v1899 = vadd.f32 0.0, %v1898
    %v1900 = vpop.f32.mrf.mxu0
    %v1901 = vadd.f32 0.0, %v1900
    %1902 = vmatmul.bf16.gmra.mxu0 %v1755
    %v1903 = vpop.f32.mrf.mxu0
    %v1904 = vadd.f32 0.0, %v1903
    %v1905 = vpop.f32.mrf.mxu0
    %v1906 = vadd.f32 0.0, %v1905
    %1907 = vmatmul.bf16.gmra.mxu0 %v1757
    %v1908 = vpop.f32.mrf.mxu0
    %v1909 = vadd.f32 0.0, %v1908
    %v1910 = vpop.f32.mrf.mxu0
    %v1911 = vadd.f32 0.0, %v1910
    %1912 = vmatmul.bf16.gmra.mxu0 %v1759
    %v1913 = vpop.f32.mrf.mxu0
    %v1914 = vadd.f32 0.0, %v1913
    %v1915 = vpop.f32.mrf.mxu0
    %v1916 = vadd.f32 0.0, %v1915
    %1917 = vdwg.mxu0
    %1918 = vmatpush.bf16.msra.mxu0 %v1872
    %1919 = vmatpush.bf16.msra.mxu0 %v1871
    %1920 = vmatpush.bf16.msra.mxu0 %v1870
    %1921 = vmatpush.bf16.msra.mxu0 %v1869
    %1922 = vmatpush.bf16.msra.mxu0 %v1868
    %1923 = vmatpush.bf16.msra.mxu0 %v1867
    %1924 = vmatpush.bf16.msra.mxu0 %v1866
    %1925 = vmatpush.bf16.msra.mxu0 %v1865
    %1926 = vmatmul.bf16.gmra.mxu0 %v1754
    %v1927 = vpop.f32.mrf.mxu0
    %v1928 = vadd.f32 %v1899, %v1927
    %v1929 = vpop.f32.mrf.mxu0
    %v1930 = vadd.f32 %v1901, %v1929
    %1931 = vmatmul.bf16.gmra.mxu0 %v1756
    %v1932 = vpop.f32.mrf.mxu0
    %v1933 = vadd.f32 %v1904, %v1932
    %v1934 = vpop.f32.mrf.mxu0
    %v1935 = vadd.f32 %v1906, %v1934
    %1936 = vmatmul.bf16.gmra.mxu0 %v1758
    %v1937 = vpop.f32.mrf.mxu0
    %v1938 = vadd.f32 %v1909, %v1937
    %v1939 = vpop.f32.mrf.mxu0
    %v1940 = vadd.f32 %v1911, %v1939
    %1941 = vmatmul.bf16.gmra.mxu0 %v1760
    %v1942 = vpop.f32.mrf.mxu0
    %v1943 = vadd.f32 %v1914, %v1942
    %v1944 = vpop.f32.mrf.mxu0
    %v1945 = vadd.f32 %v1916, %v1944
    %1946 = vdwg.mxu0
    %v1947 = vadd.f32 %v1301, %v1928
    %v1948 = vadd.f32 %v1302, %v1930
    %v1949 = vadd.f32 %v1303, %v1933
    %v1950 = vadd.f32 %v1304, %v1935
    %v1951 = vadd.f32 %v1305, %v1938
    %v1952 = vadd.f32 %v1306, %v1940
    %v1953 = vadd.f32 %v1307, %v1943
    %v1954 = vadd.f32 %v1308, %v1945
    %v1955 = vperm.slane %v31, 4
    %v1956 = vadd.f32 %v1947, %v1955
    %v1957 = vadd.f32 %v1948, %v1955
    %v1958 = vadd.f32 %v1949, %v1955
    %v1959 = vadd.f32 %v1950, %v1955
    %v1960 = vadd.f32 %v1951, %v1955
    %v1961 = vadd.f32 %v1952, %v1955
    %v1962 = vadd.f32 %v1953, %v1955
    %v1963 = vadd.f32 %v1954, %v1955
    %v1964 = vpack.c.bf16 %v1957, %v1956
    %v1965 = vpack.c.bf16 %v1959, %v1958
    %v1966 = vpack.c.bf16 %v1961, %v1960
    %v1967 = vpack.c.bf16 %v1963, %v1962
    %v1968 = vld [vmem:[%s6] sm:$0xf]
    %v1969 = vld [vmem:[%s6 + $0x4] sm:$0xf]
    %v1970 = vld [vmem:[%s6 + $0x8] sm:$0xf]
    %v1971 = vld [vmem:[%s6 + $0xc] sm:$0xf]
    %v1972 = vld [vmem:[%s6 + $0x10] sm:$0xf]
    %v1973 = vld [vmem:[%s6 + $0x14] sm:$0xf]
    %v1974 = vld [vmem:[%s6 + $0x18] sm:$0xf]
    %v1975 = vld [vmem:[%s6 + $0x1c] sm:$0xf]
    %v1976 = vperm.slane %v31, 5
    %v1985 = vunpack.c.l.b16 %v1968
    %v1986 = vunpack.c.l.b16 %v1969
    %v1987 = vunpack.c.l.b16 %v1970
    %v1988 = vunpack.c.l.b16 %v1971
    %v1989 = vunpack.c.l.b16 %v1972
    %v1990 = vunpack.c.l.b16 %v1973
    %v1991 = vunpack.c.l.b16 %v1974
    %v1992 = vunpack.c.l.b16 %v1975
    %v1993 = vpack.c.b16 %v1986, %v1985
    %v1994 = vpack.c.b16 %v1988, %v1987
    %v1995 = vpack.c.b16 %v1990, %v1989
    %v1996 = vpack.c.b16 %v1992, %v1991
    %v2002 = vsel %vm159, %v1964, 0
    %v2005 = vsel %vm159, %v1965, 0
    %v2008 = vsel %vm159, %v1966, 0
    %v2011 = vsel %vm159, %v1967, 0
    %2013 = vmatpush.bf16.msra.mxu0 0
    %2014 = vmatpush.bf16.msra.mxu0 0
    %2015 = vmatpush.bf16.msra.mxu0 0
    %2016 = vmatpush.bf16.msra.mxu0 0
    %2017 = vmatpush.bf16.msra.mxu0 %v1996
    %2018 = vmatpush.bf16.msra.mxu0 %v1995
    %2019 = vmatpush.bf16.msra.mxu0 %v1994
    %2020 = vmatpush.bf16.msra.mxu0 %v1993
    %2021 = vmatmul.bf16.gmra.mxu0 %v2002
    %v2022 = vpop.f32.mrf.mxu0
    %v2023 = vadd.f32 %v1976, %v2022
    %v2024 = vpop.f32.mrf.mxu0
    %v2025 = vadd.f32 %v1976, %v2024
    %2026 = vmatmul.bf16.gmra.mxu0 %v2005
    %v2027 = vpop.f32.mrf.mxu0
    %v2028 = vadd.f32 %v1976, %v2027
    %v2029 = vpop.f32.mrf.mxu0
    %v2030 = vadd.f32 %v1976, %v2029
    %2031 = vmatmul.bf16.gmra.mxu0 %v2008
    %v2032 = vpop.f32.mrf.mxu0
    %v2033 = vadd.f32 %v1976, %v2032
    %v2034 = vpop.f32.mrf.mxu0
    %v2035 = vadd.f32 %v1976, %v2034
    %2036 = vmatmul.bf16.gmra.mxu0 %v2011
    %v2037 = vpop.f32.mrf.mxu0
    %v2038 = vadd.f32 %v1976, %v2037
    %v2039 = vpop.f32.mrf.mxu0
    %v2040 = vadd.f32 %v1976, %v2039
    %2041 = vdwg.mxu0
    %2042 = vst [vmem:[#allocation2] sm:$0xff] %v2023
    %2043 = vst [vmem:[#allocation2 + $0x8] sm:$0xff] %v2025
    %2044 = vst [vmem:[#allocation2 + $0x10] sm:$0xff] %v2028
    %2045 = vst [vmem:[#allocation2 + $0x18] sm:$0xff] %v2030
    %2046 = vst [vmem:[#allocation2 + $0x20] sm:$0xff] %v2033
    %2047 = vst [vmem:[#allocation2 + $0x28] sm:$0xff] %v2035
    %2048 = vst [vmem:[#allocation2 + $0x30] sm:$0xff] %v2038
    %2049 = vst [vmem:[#allocation2 + $0x38] sm:$0xff] %v2040
    // Predicated region
    $region34: #{model_forward.1} parent=1 // pred_check
      _
    $region35: #{model_forward.1} parent=1 // pred_check_branch
      %2051 = sbr.rel (0) target = $region37
    $region36: #{model_forward.1} parent=1 // pred_region
      %2053 = vsyncadd [#allocation3], 0
      %s2054 = sshll.u32 [#allocation2], 4
      %s2055 = int_to_ptr.vmem [resolvable:$true] %s2054
      %s2056 = sshll.u32 %s8, 4
      %s2057 = int_to_ptr.hbm [resolvable:$true] %s2056
      %2062 = dma.vmem_to_hbm [thread:$0]  %s2055, 1024, %s2057, [#allocation3], 128, 128, 8
    $region37: #{model_forward.1} parent=1 // pred_fallthru
      _
    // Predicated region
    $region38: #{model_forward.1} parent=1 // pred_check
      _
    $region39: #{model_forward.1} parent=1 // pred_check_branch
      %2064 = sbr.rel (0) target = $region41
    $region40: #{model_forward.1} parent=1 // pred_region
      %2066 = dma.done [#allocation3], 1024
    $region41: #{model_forward.1} parent=1 // pred_fallthru
      _
    %2067 = vsyncpa [#allocation3], 1

</llo_original>
